<compile_context>
chip_gen: v5e
topology: v5e:2x2
jax: 0.10.0
libtpu: 0.0.40
codegen_flags: <defaults>
</compile_context>

<pallas_src>
import functools
import math

import jax
import jax.numpy as jnp
import numpy as np
from jax import lax
from jax.experimental import pallas as pl
from jax.experimental.pallas import tpu as pltpu


def _round_up(x, m):
    return (x + m - 1) // m * m


def _char_cnn_fused_kernel(chars_ref, fw_ref, b_ref, out_ref, *, K, P_real):
    chars = chars_ref[...]                       # (bn, C_pad) int32
    bn, C_pad = chars.shape
    KV, F_pad = fw_ref.shape                     # fused weight: (K*V, F_pad) bf16
    V = KV // K
    P_pad = C_pad - K + 1                        # multiple of 8 (wrapper guarantees)

    # One-hot conv windows: windows[b, p, k*V + v] = (chars[b, p+k] == v), built in bf16
    # (0/1 exact).  Pure elementwise compares against a K*V iota band -- no gathers, no
    # lane concatenates.  Each tap k lands in its own V-band, so OR over taps is exact.
    iota_kv = lax.broadcasted_iota(jnp.int32, (1, 1, KV), 2)
    hit = None
    for k in range(K):
        ck = chars[:, k:k + P_pad][:, :, None] + (k * V)        # (bn, P_pad, 1)
        eq = ck == iota_kv                                      # (bn, P_pad, KV) bool
        hit = eq if hit is None else jnp.logical_or(hit, eq)
    windows = hit.astype(jnp.bfloat16).reshape(bn * P_pad, KV)  # (bn*P_pad, K*V) bf16

    # Single MXU matmul against the pre-contracted (embedding @ conv-tap) weight:
    # bf16 x bf16 with f32 accumulation.
    acc = jnp.dot(windows, fw_ref[...], preferred_element_type=jnp.float32)
    acc = acc.reshape(bn, P_pad, F_pad)                         # (bn, P_pad, F_pad) f32

    # Mask synthetic conv positions (added only for sublane alignment) before the max.
    if P_pad != P_real:
        pos = lax.broadcasted_iota(jnp.int32, (1, P_pad, F_pad), 1)
        acc = jnp.where(pos < P_real, acc, jnp.finfo(jnp.float32).min)

    # Max over character positions, then bias + ReLU.
    # Exact reordering: bias is constant over positions and ReLU is monotone, so
    # relu(max_p(acc_p + b)) == relu(max_p(acc_p) + b).
    out_ref[...] = jnp.maximum(jnp.max(acc, axis=1) + b_ref[...], 0.0)   # (bn, F_pad)


def prepare_token_characters_params(emb_table, conv_w, conv_b):
    """Fold Embedding + Conv1d into one matmul operand. Run ONCE per model (weights are static).

    Returns:
      fused_w : (K*V, F_pad) bf16, fused_w[k*V + v, f] = Emb(row0 zeroed)[v] . conv_w[f, :, k]
      bias    : (1, F_pad) f32
    """
    V, E = emb_table.shape
    F, E2, K = conv_w.shape
    assert E2 == E
    F_pad = _round_up(F, 128)

    # Zeroing row 0 of the table == applying the (char != 0) mask to the embeddings.
    emb = emb_table.astype(jnp.float32).at[0].set(0.0)                      # (V, E)
    fused = jnp.einsum('ve,fek->kvf', emb, conv_w.astype(jnp.float32))      # (K, V, F) f32
    fused = fused.reshape(K * V, F)
    fused = jnp.pad(fused, ((0, 0), (0, F_pad - F))).astype(jnp.bfloat16)   # lane-dense filters
    bias = jnp.pad(conv_b.astype(jnp.float32), (0, F_pad - F)).reshape(1, F_pad)
    return fused, bias


def token_characters_embedder_prepared(token_characters, fused_w, bias, *, K, F,
                                       block_n=512, vmem_limit_bytes=40 * 1024 * 1024):
    """token_characters: int32 (B, T, C).  fused_w/bias from prepare_token_characters_params.
    Returns float32 (B, T, F)."""
    B, T, C = token_characters.shape
    KV, F_pad = fused_w.shape
    assert KV % K == 0 and F_pad % 128 == 0 and F <= F_pad
    assert C >= K, "need at least one full conv window of characters"

    P_real = C - K + 1
    P_pad = _round_up(P_real, 8)          # sublane-aligned conv-position count
    C_pad = P_pad + K - 1

    N = B * T
    # 512 amortizes the ~0.35 us/step pipeline overhead and fits v7x (64 MiB VMEM) with the
    # 40 MiB scoped limit; sweep up to 1024 on v5e/v6e (128 MiB).  Clip to N for tiny inputs.
    block_n = max(8, min(block_n, _round_up(N, 8)))
    N_pad = _round_up(N, block_n)

    chars = token_characters.reshape(N, C).astype(jnp.int32)
    if (N_pad, C_pad) != (N, C):
        chars = jnp.pad(chars, ((0, N_pad - N), (0, C_pad - C)))   # padded entries = char id 0

    kernel = functools.partial(_char_cnn_fused_kernel, K=K, P_real=P_real)

    out = pl.pallas_call(
        kernel,
        out_shape=jax.ShapeDtypeStruct((N_pad, F_pad), jnp.float32),
        grid=(N_pad // block_n,),
        in_specs=[
            pl.BlockSpec((block_n, C_pad), lambda i: (i, 0)),
            # Grid-invariant (constant index_map) and tiny (K*V x 128 bf16, ~tens of KB), so
            # keeping the default double-buffering costs nothing; the V x E embedding table
            # never enters the kernel at all.
            pl.BlockSpec((KV, F_pad), lambda i: (0, 0)),
            pl.BlockSpec((1, F_pad), lambda i: (0, 0)),
        ],
        out_specs=pl.BlockSpec((block_n, F_pad), lambda i: (i, 0)),
        compiler_params=pltpu.CompilerParams(
            dimension_semantics=("parallel",),
            vmem_limit_bytes=vmem_limit_bytes),
    )(chars, fused_w, bias)

    # dropout p=0.0 -> identity
    # TODO(synk): dropout > 0 (train-mode RNG masking) not implemented; module default p=0.0.
    return out[:N, :F].reshape(B, T, F)


def token_characters_embedder(token_characters, emb_table, conv_w, conv_b, **kw):
    """One-shot convenience wrapper (re-does the weight prep every call; prefer the
    prepare_* + *_prepared pair when calling repeatedly with fixed weights)."""
    fused_w, bias = prepare_token_characters_params(emb_table, conv_w, conv_b)
    F, _, K = conv_w.shape
    return token_characters_embedder_prepared(token_characters, fused_w, bias, K=K, F=F, **kw)


def _reference(token_characters, emb_table, conv_w, conv_b):
    """Pure-JAX f32 mirror of the PyTorch forward (Embedding + masked CnnEncoder)."""
    B, T, C = token_characters.shape
    F, E, K = conv_w.shape
    mask = (token_characters != 0).astype(jnp.float32)                # (B,T,C)
    emb = emb_table[token_characters] * mask[..., None]               # (B,T,C,E)
    P = C - K + 1
    acc = jnp.zeros((B, T, P, F), jnp.float32) + conv_b
    wk = jnp.transpose(conv_w, (2, 1, 0))                             # (K,E,F)
    for k in range(K):
        acc = acc + jnp.einsum('btce,ef->btcf', emb[:, :, k:k + P, :], wk[k])
    acc = jnp.maximum(acc, 0.0)
    return jnp.max(acc, axis=2)                                       # (B,T,F)


if __name__ == "__main__":
    B, T, C = 2, 8, 16           # batch, tokens, characters per token
    V, E = 64, 32                # char vocab, char embedding dim
    F, K = 32, 3                 # conv filters (encoder output dim), kernel width

    key = jax.random.PRNGKey(0)
    k_ids, k_emb, k_w, k_b = jax.random.split(key, 4)

    # char ids, with some zeros acting as padding
    token_characters = jax.random.randint(k_ids, (B, T, C), 0, V, dtype=jnp.int32)

    # Embedding: xavier_uniform_
    bound_e = math.sqrt(6.0 / (V + E))
    emb_table = jax.random.uniform(k_emb, (V, E), jnp.float32, -bound_e, bound_e)

    # Conv1d(E, F, K) default init: uniform(-1/sqrt(E*K), 1/sqrt(E*K))
    bound_c = 1.0 / math.sqrt(E * K)
    conv_w = jax.random.uniform(k_w, (F, E, K), jnp.float32, -bound_c, bound_c)
    conv_b = jax.random.uniform(k_b, (F,), jnp.float32, -bound_c, bound_c)

    # Weight prep is hoisted out of the per-call path (runs once per model).
    fused_w, bias = prepare_token_characters_params(emb_table, conv_w, conv_b)
    out = token_characters_embedder_prepared(token_characters, fused_w, bias, K=K, F=F)
    out = jax.block_until_ready(out)

    ref = _reference(token_characters, emb_table, conv_w, conv_b)
    # Tolerances loosened vs the pure-f32 version: the fused weight is rounded to bf16
    # (~2^-8 relative) for native MXU throughput; the one-hot operand is exact in bf16.
    np.testing.assert_allclose(np.asarray(out), np.asarray(ref), rtol=2e-2, atol=2e-3)

    print("KERNEL_OK")
</pallas_src>

<mosaic_0001>
module attributes {stable_mosaic.version = 11 : i64} {
  func.func @_char_cnn_fused_kernel(%arg0: i32, %arg1: memref<16x18xi32, #tpu.memory_space<vmem>>, %arg2: memref<192x128xbf16, #tpu.memory_space<vmem>>, %arg3: memref<1x128xf32, #tpu.memory_space<vmem>>, %arg4: memref<16x128xf32, #tpu.memory_space<vmem>>) attributes {dimension_semantics = [#tpu.dimension_semantics<parallel>], iteration_bounds = array<i64: 1>, scalar_prefetch = 0 : i64, scratch_operands = 0 : i64, tpu.core_type = #tpu.core_type<tc>, window_params = [{transform_indices = @transform_0, window_bounds = array<i64: 16, 18>}, {pipeline_mode = #tpu.pipeline_mode<synchronous>, transform_indices = @transform_1, window_bounds = array<i64: 192, 128>}, {pipeline_mode = #tpu.pipeline_mode<synchronous>, transform_indices = @transform_2, window_bounds = array<i64: 1, 128>}, {transform_indices = @transform_3, window_bounds = array<i64: 16, 128>}]} {
    %c0 = arith.constant 0 : index
    %c0_0 = arith.constant 0 : index
    %0 = vector.load %arg1[%c0, %c0_0] : memref<16x18xi32, #tpu.memory_space<vmem>>, vector<16x18xi32>
    %1 = tpu.iota {dimensions = array<i32: 2>} : vector<1x1x192xi32>
    %2 = vector.extract_strided_slice %0 {offsets = [0, 0], sizes = [16, 16], strides = [1, 1]} : vector<16x18xi32> to vector<16x16xi32>
    %3 = vector.shape_cast %2 : vector<16x16xi32> to vector<16x16x1xi32>
    %c0_i32 = arith.constant 0 : i32
    %4 = vector.broadcast %c0_i32 : i32 to vector<16x16x1xi32>
    %5 = arith.addi %3, %4 : vector<16x16x1xi32>
    %6 = vector.broadcast %5 : vector<16x16x1xi32> to vector<16x16x192xi32>
    %7 = vector.broadcast %1 : vector<1x1x192xi32> to vector<16x16x192xi32>
    %8 = arith.cmpi eq, %6, %7 : vector<16x16x192xi32>
    %9 = vector.extract_strided_slice %0 {offsets = [0, 1], sizes = [16, 16], strides = [1, 1]} : vector<16x18xi32> to vector<16x16xi32>
    %10 = vector.shape_cast %9 : vector<16x16xi32> to vector<16x16x1xi32>
    %c64_i32 = arith.constant 64 : i32
    %11 = vector.broadcast %c64_i32 : i32 to vector<16x16x1xi32>
    %12 = arith.addi %10, %11 : vector<16x16x1xi32>
    %13 = vector.broadcast %12 : vector<16x16x1xi32> to vector<16x16x192xi32>
    %14 = vector.broadcast %1 : vector<1x1x192xi32> to vector<16x16x192xi32>
    %15 = arith.cmpi eq, %13, %14 : vector<16x16x192xi32>
    %16 = arith.ori %8, %15 : vector<16x16x192xi1>
    %17 = vector.extract_strided_slice %0 {offsets = [0, 2], sizes = [16, 16], strides = [1, 1]} : vector<16x18xi32> to vector<16x16xi32>
    %18 = vector.shape_cast %17 : vector<16x16xi32> to vector<16x16x1xi32>
    %c128_i32 = arith.constant 128 : i32
    %19 = vector.broadcast %c128_i32 : i32 to vector<16x16x1xi32>
    %20 = arith.addi %18, %19 : vector<16x16x1xi32>
    %21 = vector.broadcast %20 : vector<16x16x1xi32> to vector<16x16x192xi32>
    %22 = vector.broadcast %1 : vector<1x1x192xi32> to vector<16x16x192xi32>
    %23 = arith.cmpi eq, %21, %22 : vector<16x16x192xi32>
    %24 = arith.ori %16, %23 : vector<16x16x192xi1>
    %25 = arith.extui %24 : vector<16x16x192xi1> to vector<16x16x192xi32>
    %26 = arith.sitofp %25 : vector<16x16x192xi32> to vector<16x16x192xf32>
    %27 = arith.truncf %26 : vector<16x16x192xf32> to vector<16x16x192xbf16>
    %28 = vector.shape_cast %27 : vector<16x16x192xbf16> to vector<256x192xbf16>
    %c0_1 = arith.constant 0 : index
    %c0_2 = arith.constant 0 : index
    %29 = vector.load %arg2[%c0_1, %c0_2] : memref<192x128xbf16, #tpu.memory_space<vmem>>, vector<192x128xbf16>
    %cst = arith.constant dense<0.000000e+00> : vector<256x128xf32>
    %30 = tpu.matmul %28, %29, %cst {dimension_numbers = #tpu.dot_dimension_numbers<[1], [0], [0], [1], [0, 0, 1, 1], [], []>} : vector<256x192xbf16>, vector<192x128xbf16>, vector<256x128xf32> -> vector<256x128xf32>
    %31 = vector.shape_cast %30 : vector<256x128xf32> to vector<16x16x128xf32>
    %32 = tpu.iota {dimensions = array<i32: 1>} : vector<1x16x128xi32>
    %c14_i32 = arith.constant 14 : i32
    %33 = vector.broadcast %c14_i32 : i32 to vector<1x16x128xi32>
    %34 = arith.cmpi slt, %32, %33 : vector<1x16x128xi32>
    %cst_3 = arith.constant -3.40282347E+38 : f32
    %35 = vector.shape_cast %34 : vector<1x16x128xi1> to vector<1x16x128xi1>
    %36 = vector.broadcast %35 : vector<1x16x128xi1> to vector<16x16x128xi1>
    %37 = vector.broadcast %cst_3 : f32 to vector<16x16x128xf32>
    %38 = arith.select %36, %31, %37 : vector<16x16x128xi1>, vector<16x16x128xf32>
    %cst_4 = arith.constant dense<0xFF800000> : vector<16x128xf32>
    %39 = vector.multi_reduction <maximumf>, %38, %cst_4 [1] : vector<16x16x128xf32> to vector<16x128xf32>
    %c0_5 = arith.constant 0 : index
    %c0_6 = arith.constant 0 : index
    %40 = vector.load %arg3[%c0_5, %c0_6] : memref<1x128xf32, #tpu.memory_space<vmem>>, vector<1x128xf32>
    %41 = vector.broadcast %40 : vector<1x128xf32> to vector<16x128xf32>
    %42 = arith.addf %39, %41 : vector<16x128xf32>
    %cst_7 = arith.constant 0.000000e+00 : f32
    %43 = vector.broadcast %cst_7 : f32 to vector<16x128xf32>
    %44 = arith.maximumf %42, %43 : vector<16x128xf32>
    %c0_8 = arith.constant 0 : index
    %c0_9 = arith.constant 0 : index
    %45 = vector.load %arg4[%c0_8, %c0_9] : memref<16x128xf32, #tpu.memory_space<vmem>>, vector<16x128xf32>
    tpu.vector_store %arg4[%c0_8, %c0_9], %44 {strides = array<i32>} : memref<16x128xf32, #tpu.memory_space<vmem>>, vector<16x128xf32>,
    return
  }
  func.func @transform_0(%arg0: i32) -> (i32, i32) {
    %c0_i32 = arith.constant 0 : i32
    %c0_i32_0 = arith.constant 0 : i32
    return %arg0, %c0_i32 : i32, i32
  }
  func.func @transform_1(%arg0: i32) -> (i32, i32) {
    %c0_i32 = arith.constant 0 : i32
    %c0_i32_0 = arith.constant 0 : i32
    %c0_i32_1 = arith.constant 0 : i32
    return %c0_i32, %c0_i32_0 : i32, i32
  }
  func.func @transform_2(%arg0: i32) -> (i32, i32) {
    %c0_i32 = arith.constant 0 : i32
    %c0_i32_0 = arith.constant 0 : i32
    %c0_i32_1 = arith.constant 0 : i32
    return %c0_i32, %c0_i32_0 : i32, i32
  }
  func.func @transform_3(%arg0: i32) -> (i32, i32) {
    %c0_i32 = arith.constant 0 : i32
    %c0_i32_0 = arith.constant 0 : i32
    return %arg0, %c0_i32 : i32, i32
  }
}

</mosaic_0001>

<llo_original>
// kernel: tpu_custom_call.1
$region0: #{tpu_custom_call.1}
  #allocation0 [shape = 'u32[]', space=smem, size = 0x4, offset = 0x4, fixed_abs, tag = 'smem constant byte address 0x4 - core index']
  #allocation1 [shape = 'u32[72,128]{1,0:T(1,128)}', space=vmem, size = 0x9000, scoped, tag = 'internal scratch']
  %s0 = inlined_call_operand.hbm [shape: s32[16,18], index: 0, kind: input, shape index: {}]
  %s1 = inlined_call_operand.hbm [shape: bf16[192,128], index: 1, kind: input, shape index: {}]
  %s2 = inlined_call_operand.vmem [shape: f32[1,128], index: 2, kind: input, shape index: {}]
  %s3 = inlined_call_operand.hbm [shape: f32[16,128], index: 3, kind: output, shape index: {}]
  %s4 = sld [smem:[#allocation0]]
  $region30: #{tpu_custom_call.1} parent=0
    _
  %s6 = ssub.s32 1, %s4
  %s7 = scalar_select 0, %s6, %s4
  $region1: #{tpu_custom_call.1} parent=0
    #allocation2 [shape = 'u8[8192]{0}', space=vmem, size = 0x2000, scoped, tag = 'input window, operand 0, single buffered']
    #allocation3 [shape = 's32[1]{0}', space=sflag, size = 0x4, scoped, tag = 'scoped memory for tpu_custom_call.1']
    #allocation4 [shape = 's32[1]{0}', space=sflag, size = 0x4, scoped, tag = 'scoped memory for tpu_custom_call.1']
    #allocation5 [shape = 'u8[49152]{0}', space=vmem, size = 0xc000, scoped, tag = 'input window, operand 1, single buffered']
    #allocation6 [shape = 's32[1]{0}', space=sflag, size = 0x4, scoped, tag = 'scoped memory for tpu_custom_call.1']
    #allocation7 [shape = 'u8[8192]{0}', space=vmem, size = 0x2000, scoped, tag = 'output window, operand 0, single buffered']
    %8 = vsyncpa [#allocation3], 0
    %9 = vsyncpa [#allocation6], 0
    %10 = vsyncpa [#allocation4], 0
    // Predicated region
    $region2: #{tpu_custom_call.1} parent=1 // pred_check
      _
    $region3: #{tpu_custom_call.1} parent=1 // pred_check_branch
      %12 = sbr.rel (0) target = $region5
    $region4: #{tpu_custom_call.1} parent=1 // pred_region
      %14 = vsyncadd [#allocation3], 0
      %s15 = sshll.u32 %s0, 4
      %s16 = int_to_ptr.hbm [resolvable:$true] %s15
      %s17 = sshll.u32 [#allocation2], 4
      %s18 = int_to_ptr.vmem [resolvable:$true] %s17
      %23 = dma.hbm_to_vmem [thread:$0]  %s16, 256, %s18, [#allocation3], 128, 128, 8
    $region5: #{tpu_custom_call.1} parent=1 // pred_fallthru
      _
    // Predicated region
    $region6: #{tpu_custom_call.1} parent=1 // pred_check
      _
    $region7: #{tpu_custom_call.1} parent=1 // pred_check_branch
      %25 = sbr.rel (0) target = $region9
    $region8: #{tpu_custom_call.1} parent=1 // pred_region
      %27 = vsyncadd [#allocation6], 0
      %s28 = sshll.u32 %s1, 4
      %s29 = int_to_ptr.hbm [resolvable:$true] %s28
      %s30 = sshll.u32 [#allocation5], 4
      %s31 = int_to_ptr.vmem [resolvable:$true] %s30
      %36 = dma.hbm_to_vmem [thread:$0]  %s29, 1536, %s31, [#allocation6], 64, 64, 4
    $region9: #{tpu_custom_call.1} parent=1 // pred_fallthru
      _
    // Predicated region
    $region10: #{tpu_custom_call.1} parent=1 // pred_check
      _
    $region11: #{tpu_custom_call.1} parent=1 // pred_check_branch
      %38 = sbr.rel (0) target = $region13
    $region12: #{tpu_custom_call.1} parent=1 // pred_region
      _
    $region13: #{tpu_custom_call.1} parent=1 // pred_fallthru
      _
    // Predicated region
    $region14: #{tpu_custom_call.1} parent=1 // pred_check
      _
    $region15: #{tpu_custom_call.1} parent=1 // pred_check_branch
      %40 = sbr.rel (0) target = $region17
    $region16: #{tpu_custom_call.1} parent=1 // pred_region
      %42 = dma.done [#allocation3], 256
    $region17: #{tpu_custom_call.1} parent=1 // pred_fallthru
      _
    // Predicated region
    $region18: #{tpu_custom_call.1} parent=1 // pred_check
      _
    $region19: #{tpu_custom_call.1} parent=1 // pred_check_branch
      %44 = sbr.rel (0) target = $region21
    $region20: #{tpu_custom_call.1} parent=1 // pred_region
      %46 = dma.done [#allocation6], 1536
    $region21: #{tpu_custom_call.1} parent=1 // pred_fallthru
      _
    %v48 = vld [vmem:[#allocation2] sm:$0xff]
    %v49 = vld [vmem:[#allocation2 + $0x8] sm:$0xff]
    %v50 = vlaneseq
    %v51 = vand.u32 %v50, 127
    %v52 = vadd.s32 %v51, 128
    %v53 = vperm.slane %v48, 0
    %v54 = vlaneseq
    %v55 = vshrl.u32 %v54, 7
    %57 = vset.pattern.permute.xlu0 %v55
    %58 = vperm.xlu0 %57, %v53
    %v59 = vpop.permute.xlu0 %58
    %v60 = vlaneseq
    %v61 = vshrl.u32 %v60, 7
    %v62 = vadd.s32 %v61, 8
    %63 = vset.pattern.permute.xlu0 %v62
    %64 = vperm.xlu0 %63, %v53
    %v65 = vpop.permute.xlu0 %64
    %v66 = vperm.slane %v48, 1
    %v67 = vlaneseq
    %v68 = vshrl.u32 %v67, 7
    %70 = vset.pattern.permute.xlu0 %v68
    %71 = vperm.xlu0 %70, %v66
    %v72 = vpop.permute.xlu0 %71
    %v73 = vlaneseq
    %v74 = vshrl.u32 %v73, 7
    %v75 = vadd.s32 %v74, 8
    %76 = vset.pattern.permute.xlu0 %v75
    %77 = vperm.xlu0 %76, %v66
    %v78 = vpop.permute.xlu0 %77
    %v79 = vperm.slane %v48, 2
    %v80 = vlaneseq
    %v81 = vshrl.u32 %v80, 7
    %83 = vset.pattern.permute.xlu0 %v81
    %84 = vperm.xlu0 %83, %v79
    %v85 = vpop.permute.xlu0 %84
    %v86 = vlaneseq
    %v87 = vshrl.u32 %v86, 7
    %v88 = vadd.s32 %v87, 8
    %89 = vset.pattern.permute.xlu0 %v88
    %90 = vperm.xlu0 %89, %v79
    %v91 = vpop.permute.xlu0 %90
    %v92 = vperm.slane %v48, 3
    %v93 = vlaneseq
    %v94 = vshrl.u32 %v93, 7
    %96 = vset.pattern.permute.xlu0 %v94
    %97 = vperm.xlu0 %96, %v92
    %v98 = vpop.permute.xlu0 %97
    %v99 = vlaneseq
    %v100 = vshrl.u32 %v99, 7
    %v101 = vadd.s32 %v100, 8
    %102 = vset.pattern.permute.xlu0 %v101
    %103 = vperm.xlu0 %102, %v92
    %v104 = vpop.permute.xlu0 %103
    %v105 = vperm.slane %v48, 4
    %v106 = vlaneseq
    %v107 = vshrl.u32 %v106, 7
    %109 = vset.pattern.permute.xlu0 %v107
    %110 = vperm.xlu0 %109, %v105
    %v111 = vpop.permute.xlu0 %110
    %v112 = vlaneseq
    %v113 = vshrl.u32 %v112, 7
    %v114 = vadd.s32 %v113, 8
    %115 = vset.pattern.permute.xlu0 %v114
    %116 = vperm.xlu0 %115, %v105
    %v117 = vpop.permute.xlu0 %116
    %v118 = vperm.slane %v48, 5
    %v119 = vlaneseq
    %v120 = vshrl.u32 %v119, 7
    %122 = vset.pattern.permute.xlu0 %v120
    %123 = vperm.xlu0 %122, %v118
    %v124 = vpop.permute.xlu0 %123
    %v125 = vlaneseq
    %v126 = vshrl.u32 %v125, 7
    %v127 = vadd.s32 %v126, 8
    %128 = vset.pattern.permute.xlu0 %v127
    %129 = vperm.xlu0 %128, %v118
    %v130 = vpop.permute.xlu0 %129
    %v131 = vperm.slane %v48, 6
    %v132 = vlaneseq
    %v133 = vshrl.u32 %v132, 7
    %135 = vset.pattern.permute.xlu0 %v133
    %136 = vperm.xlu0 %135, %v131
    %v137 = vpop.permute.xlu0 %136
    %v138 = vlaneseq
    %v139 = vshrl.u32 %v138, 7
    %v140 = vadd.s32 %v139, 8
    %141 = vset.pattern.permute.xlu0 %v140
    %142 = vperm.xlu0 %141, %v131
    %v143 = vpop.permute.xlu0 %142
    %v144 = vperm.slane %v48, 7
    %v145 = vlaneseq
    %v146 = vshrl.u32 %v145, 7
    %148 = vset.pattern.permute.xlu0 %v146
    %149 = vperm.xlu0 %148, %v144
    %v150 = vpop.permute.xlu0 %149
    %v151 = vlaneseq
    %v152 = vshrl.u32 %v151, 7
    %v153 = vadd.s32 %v152, 8
    %154 = vset.pattern.permute.xlu0 %v153
    %155 = vperm.xlu0 %154, %v144
    %v156 = vpop.permute.xlu0 %155
    %v157 = vperm.slane %v49, 0
    %v158 = vlaneseq
    %v159 = vshrl.u32 %v158, 7
    %161 = vset.pattern.permute.xlu0 %v159
    %162 = vperm.xlu0 %161, %v157
    %v163 = vpop.permute.xlu0 %162
    %v164 = vlaneseq
    %v165 = vshrl.u32 %v164, 7
    %v166 = vadd.s32 %v165, 8
    %167 = vset.pattern.permute.xlu0 %v166
    %168 = vperm.xlu0 %167, %v157
    %v169 = vpop.permute.xlu0 %168
    %v170 = vperm.slane %v49, 1
    %v171 = vlaneseq
    %v172 = vshrl.u32 %v171, 7
    %174 = vset.pattern.permute.xlu0 %v172
    %175 = vperm.xlu0 %174, %v170
    %v176 = vpop.permute.xlu0 %175
    %v177 = vlaneseq
    %v178 = vshrl.u32 %v177, 7
    %v179 = vadd.s32 %v178, 8
    %180 = vset.pattern.permute.xlu0 %v179
    %181 = vperm.xlu0 %180, %v170
    %v182 = vpop.permute.xlu0 %181
    %v183 = vperm.slane %v49, 2
    %v184 = vlaneseq
    %v185 = vshrl.u32 %v184, 7
    %187 = vset.pattern.permute.xlu0 %v185
    %188 = vperm.xlu0 %187, %v183
    %v189 = vpop.permute.xlu0 %188
    %v190 = vlaneseq
    %v191 = vshrl.u32 %v190, 7
    %v192 = vadd.s32 %v191, 8
    %193 = vset.pattern.permute.xlu0 %v192
    %194 = vperm.xlu0 %193, %v183
    %v195 = vpop.permute.xlu0 %194
    %v196 = vperm.slane %v49, 3
    %v197 = vlaneseq
    %v198 = vshrl.u32 %v197, 7
    %200 = vset.pattern.permute.xlu0 %v198
    %201 = vperm.xlu0 %200, %v196
    %v202 = vpop.permute.xlu0 %201
    %v203 = vlaneseq
    %v204 = vshrl.u32 %v203, 7
    %v205 = vadd.s32 %v204, 8
    %206 = vset.pattern.permute.xlu0 %v205
    %207 = vperm.xlu0 %206, %v196
    %v208 = vpop.permute.xlu0 %207
    %v209 = vperm.slane %v49, 4
    %v210 = vlaneseq
    %v211 = vshrl.u32 %v210, 7
    %213 = vset.pattern.permute.xlu0 %v211
    %214 = vperm.xlu0 %213, %v209
    %v215 = vpop.permute.xlu0 %214
    %v216 = vlaneseq
    %v217 = vshrl.u32 %v216, 7
    %v218 = vadd.s32 %v217, 8
    %219 = vset.pattern.permute.xlu0 %v218
    %220 = vperm.xlu0 %219, %v209
    %v221 = vpop.permute.xlu0 %220
    %v222 = vperm.slane %v49, 5
    %v223 = vlaneseq
    %v224 = vshrl.u32 %v223, 7
    %226 = vset.pattern.permute.xlu0 %v224
    %227 = vperm.xlu0 %226, %v222
    %v228 = vpop.permute.xlu0 %227
    %v229 = vlaneseq
    %v230 = vshrl.u32 %v229, 7
    %v231 = vadd.s32 %v230, 8
    %232 = vset.pattern.permute.xlu0 %v231
    %233 = vperm.xlu0 %232, %v222
    %v234 = vpop.permute.xlu0 %233
    %v235 = vperm.slane %v49, 6
    %v236 = vlaneseq
    %v237 = vshrl.u32 %v236, 7
    %239 = vset.pattern.permute.xlu0 %v237
    %240 = vperm.xlu0 %239, %v235
    %v241 = vpop.permute.xlu0 %240
    %v242 = vlaneseq
    %v243 = vshrl.u32 %v242, 7
    %v244 = vadd.s32 %v243, 8
    %245 = vset.pattern.permute.xlu0 %v244
    %246 = vperm.xlu0 %245, %v235
    %v247 = vpop.permute.xlu0 %246
    %v248 = vperm.slane %v49, 7
    %v249 = vlaneseq
    %v250 = vshrl.u32 %v249, 7
    %252 = vset.pattern.permute.xlu0 %v250
    %253 = vperm.xlu0 %252, %v248
    %v254 = vpop.permute.xlu0 %253
    %v255 = vlaneseq
    %v256 = vshrl.u32 %v255, 7
    %v257 = vadd.s32 %v256, 8
    %258 = vset.pattern.permute.xlu0 %v257
    %259 = vperm.xlu0 %258, %v248
    %v260 = vpop.permute.xlu0 %259
    %vm261 = vcmp.eq.s32.totalorder %v59, %v51
    %vm262 = vcmp.eq.s32.totalorder %v59, %v52
    %vm263 = vcmp.eq.s32.totalorder %v65, %v51
    %vm264 = vcmp.eq.s32.totalorder %v65, %v52
    %vm265 = vcmp.eq.s32.totalorder %v72, %v51
    %vm266 = vcmp.eq.s32.totalorder %v72, %v52
    %vm267 = vcmp.eq.s32.totalorder %v78, %v51
    %vm268 = vcmp.eq.s32.totalorder %v78, %v52
    %vm269 = vcmp.eq.s32.totalorder %v85, %v51
    %vm270 = vcmp.eq.s32.totalorder %v85, %v52
    %vm271 = vcmp.eq.s32.totalorder %v91, %v51
    %vm272 = vcmp.eq.s32.totalorder %v91, %v52
    %vm273 = vcmp.eq.s32.totalorder %v98, %v51
    %vm274 = vcmp.eq.s32.totalorder %v98, %v52
    %vm275 = vcmp.eq.s32.totalorder %v104, %v51
    %vm276 = vcmp.eq.s32.totalorder %v104, %v52
    %vm277 = vcmp.eq.s32.totalorder %v111, %v51
    %vm278 = vcmp.eq.s32.totalorder %v111, %v52
    %vm279 = vcmp.eq.s32.totalorder %v117, %v51
    %vm280 = vcmp.eq.s32.totalorder %v117, %v52
    %vm281 = vcmp.eq.s32.totalorder %v124, %v51
    %vm282 = vcmp.eq.s32.totalorder %v124, %v52
    %vm283 = vcmp.eq.s32.totalorder %v130, %v51
    %vm284 = vcmp.eq.s32.totalorder %v130, %v52
    %vm285 = vcmp.eq.s32.totalorder %v137, %v51
    %vm286 = vcmp.eq.s32.totalorder %v137, %v52
    %vm287 = vcmp.eq.s32.totalorder %v143, %v51
    %vm288 = vcmp.eq.s32.totalorder %v143, %v52
    %vm289 = vcmp.eq.s32.totalorder %v150, %v51
    %vm290 = vcmp.eq.s32.totalorder %v150, %v52
    %vm291 = vcmp.eq.s32.totalorder %v156, %v51
    %vm292 = vcmp.eq.s32.totalorder %v156, %v52
    %vm293 = vcmp.eq.s32.totalorder %v163, %v51
    %vm294 = vcmp.eq.s32.totalorder %v163, %v52
    %vm295 = vcmp.eq.s32.totalorder %v169, %v51
    %vm296 = vcmp.eq.s32.totalorder %v169, %v52
    %vm297 = vcmp.eq.s32.totalorder %v176, %v51
    %vm298 = vcmp.eq.s32.totalorder %v176, %v52
    %vm299 = vcmp.eq.s32.totalorder %v182, %v51
    %vm300 = vcmp.eq.s32.totalorder %v182, %v52
    %vm301 = vcmp.eq.s32.totalorder %v189, %v51
    %vm302 = vcmp.eq.s32.totalorder %v189, %v52
    %vm303 = vcmp.eq.s32.totalorder %v195, %v51
    %vm304 = vcmp.eq.s32.totalorder %v195, %v52
    %vm305 = vcmp.eq.s32.totalorder %v202, %v51
    %vm306 = vcmp.eq.s32.totalorder %v202, %v52
    %vm307 = vcmp.eq.s32.totalorder %v208, %v51
    %vm308 = vcmp.eq.s32.totalorder %v208, %v52
    %vm309 = vcmp.eq.s32.totalorder %v215, %v51
    %vm310 = vcmp.eq.s32.totalorder %v215, %v52
    %vm311 = vcmp.eq.s32.totalorder %v221, %v51
    %vm312 = vcmp.eq.s32.totalorder %v221, %v52
    %vm313 = vcmp.eq.s32.totalorder %v228, %v51
    %vm314 = vcmp.eq.s32.totalorder %v228, %v52
    %vm315 = vcmp.eq.s32.totalorder %v234, %v51
    %vm316 = vcmp.eq.s32.totalorder %v234, %v52
    %vm317 = vcmp.eq.s32.totalorder %v241, %v51
    %vm318 = vcmp.eq.s32.totalorder %v241, %v52
    %vm319 = vcmp.eq.s32.totalorder %v247, %v51
    %vm320 = vcmp.eq.s32.totalorder %v247, %v52
    %vm321 = vcmp.eq.s32.totalorder %v254, %v51
    %vm322 = vcmp.eq.s32.totalorder %v254, %v52
    %vm323 = vcmp.eq.s32.totalorder %v260, %v51
    %vm324 = vcmp.eq.s32.totalorder %v260, %v52
    %v325 = vlaneseq
    %v326 = vshrl.u32 %v325, 7
    %v327 = vadd.s32 %v326, 1
    %328 = vset.pattern.permute.xlu0 %v327
    %329 = vperm.xlu0 %328, %v53
    %v330 = vpop.permute.xlu0 %329
    %v331 = vlaneseq
    %v332 = vshrl.u32 %v331, 7
    %v333 = vadd.s32 %v332, 9
    %334 = vset.pattern.permute.xlu0 %v333
    %335 = vperm.xlu0 %334, %v53
    %v336 = vpop.permute.xlu0 %335
    %v337 = vlaneseq
    %v338 = vshrl.u32 %v337, 7
    %v339 = vadd.s32 %v338, 1
    %340 = vset.pattern.permute.xlu0 %v339
    %341 = vperm.xlu0 %340, %v66
    %v342 = vpop.permute.xlu0 %341
    %v343 = vlaneseq
    %v344 = vshrl.u32 %v343, 7
    %v345 = vadd.s32 %v344, 9
    %346 = vset.pattern.permute.xlu0 %v345
    %347 = vperm.xlu0 %346, %v66
    %v348 = vpop.permute.xlu0 %347
    %v349 = vlaneseq
    %v350 = vshrl.u32 %v349, 7
    %v351 = vadd.s32 %v350, 1
    %352 = vset.pattern.permute.xlu0 %v351
    %353 = vperm.xlu0 %352, %v79
    %v354 = vpop.permute.xlu0 %353
    %v355 = vlaneseq
    %v356 = vshrl.u32 %v355, 7
    %v357 = vadd.s32 %v356, 9
    %358 = vset.pattern.permute.xlu0 %v357
    %359 = vperm.xlu0 %358, %v79
    %v360 = vpop.permute.xlu0 %359
    %v361 = vlaneseq
    %v362 = vshrl.u32 %v361, 7
    %v363 = vadd.s32 %v362, 1
    %364 = vset.pattern.permute.xlu0 %v363
    %365 = vperm.xlu0 %364, %v92
    %v366 = vpop.permute.xlu0 %365
    %v367 = vlaneseq
    %v368 = vshrl.u32 %v367, 7
    %v369 = vadd.s32 %v368, 9
    %370 = vset.pattern.permute.xlu0 %v369
    %371 = vperm.xlu0 %370, %v92
    %v372 = vpop.permute.xlu0 %371
    %v373 = vlaneseq
    %v374 = vshrl.u32 %v373, 7
    %v375 = vadd.s32 %v374, 1
    %376 = vset.pattern.permute.xlu0 %v375
    %377 = vperm.xlu0 %376, %v105
    %v378 = vpop.permute.xlu0 %377
    %v379 = vlaneseq
    %v380 = vshrl.u32 %v379, 7
    %v381 = vadd.s32 %v380, 9
    %382 = vset.pattern.permute.xlu0 %v381
    %383 = vperm.xlu0 %382, %v105
    %v384 = vpop.permute.xlu0 %383
    %v385 = vlaneseq
    %v386 = vshrl.u32 %v385, 7
    %v387 = vadd.s32 %v386, 1
    %388 = vset.pattern.permute.xlu0 %v387
    %389 = vperm.xlu0 %388, %v118
    %v390 = vpop.permute.xlu0 %389
    %v391 = vlaneseq
    %v392 = vshrl.u32 %v391, 7
    %v393 = vadd.s32 %v392, 9
    %394 = vset.pattern.permute.xlu0 %v393
    %395 = vperm.xlu0 %394, %v118
    %v396 = vpop.permute.xlu0 %395
    %v397 = vlaneseq
    %v398 = vshrl.u32 %v397, 7
    %v399 = vadd.s32 %v398, 1
    %400 = vset.pattern.permute.xlu0 %v399
    %401 = vperm.xlu0 %400, %v131
    %v402 = vpop.permute.xlu0 %401
    %v403 = vlaneseq
    %v404 = vshrl.u32 %v403, 7
    %v405 = vadd.s32 %v404, 9
    %406 = vset.pattern.permute.xlu0 %v405
    %407 = vperm.xlu0 %406, %v131
    %v408 = vpop.permute.xlu0 %407
    %v409 = vlaneseq
    %v410 = vshrl.u32 %v409, 7
    %v411 = vadd.s32 %v410, 1
    %412 = vset.pattern.permute.xlu0 %v411
    %413 = vperm.xlu0 %412, %v144
    %v414 = vpop.permute.xlu0 %413
    %v415 = vlaneseq
    %v416 = vshrl.u32 %v415, 7
    %v417 = vadd.s32 %v416, 9
    %418 = vset.pattern.permute.xlu0 %v417
    %419 = vperm.xlu0 %418, %v144
    %v420 = vpop.permute.xlu0 %419
    %v421 = vlaneseq
    %v422 = vshrl.u32 %v421, 7
    %v423 = vadd.s32 %v422, 1
    %424 = vset.pattern.permute.xlu0 %v423
    %425 = vperm.xlu0 %424, %v157
    %v426 = vpop.permute.xlu0 %425
    %v427 = vlaneseq
    %v428 = vshrl.u32 %v427, 7
    %v429 = vadd.s32 %v428, 9
    %430 = vset.pattern.permute.xlu0 %v429
    %431 = vperm.xlu0 %430, %v157
    %v432 = vpop.permute.xlu0 %431
    %v433 = vlaneseq
    %v434 = vshrl.u32 %v433, 7
    %v435 = vadd.s32 %v434, 1
    %436 = vset.pattern.permute.xlu0 %v435
    %437 = vperm.xlu0 %436, %v170
    %v438 = vpop.permute.xlu0 %437
    %v439 = vlaneseq
    %v440 = vshrl.u32 %v439, 7
    %v441 = vadd.s32 %v440, 9
    %442 = vset.pattern.permute.xlu0 %v441
    %443 = vperm.xlu0 %442, %v170
    %v444 = vpop.permute.xlu0 %443
    %v445 = vlaneseq
    %v446 = vshrl.u32 %v445, 7
    %v447 = vadd.s32 %v446, 1
    %448 = vset.pattern.permute.xlu0 %v447
    %449 = vperm.xlu0 %448, %v183
    %v450 = vpop.permute.xlu0 %449
    %v451 = vlaneseq
    %v452 = vshrl.u32 %v451, 7
    %v453 = vadd.s32 %v452, 9
    %454 = vset.pattern.permute.xlu0 %v453
    %455 = vperm.xlu0 %454, %v183
    %v456 = vpop.permute.xlu0 %455
    %v457 = vlaneseq
    %v458 = vshrl.u32 %v457, 7
    %v459 = vadd.s32 %v458, 1
    %460 = vset.pattern.permute.xlu0 %v459
    %461 = vperm.xlu0 %460, %v196
    %v462 = vpop.permute.xlu0 %461
    %v463 = vlaneseq
    %v464 = vshrl.u32 %v463, 7
    %v465 = vadd.s32 %v464, 9
    %466 = vset.pattern.permute.xlu0 %v465
    %467 = vperm.xlu0 %466, %v196
    %v468 = vpop.permute.xlu0 %467
    %v469 = vlaneseq
    %v470 = vshrl.u32 %v469, 7
    %v471 = vadd.s32 %v470, 1
    %472 = vset.pattern.permute.xlu0 %v471
    %473 = vperm.xlu0 %472, %v209
    %v474 = vpop.permute.xlu0 %473
    %v475 = vlaneseq
    %v476 = vshrl.u32 %v475, 7
    %v477 = vadd.s32 %v476, 9
    %478 = vset.pattern.permute.xlu0 %v477
    %479 = vperm.xlu0 %478, %v209
    %v480 = vpop.permute.xlu0 %479
    %v481 = vlaneseq
    %v482 = vshrl.u32 %v481, 7
    %v483 = vadd.s32 %v482, 1
    %484 = vset.pattern.permute.xlu0 %v483
    %485 = vperm.xlu0 %484, %v222
    %v486 = vpop.permute.xlu0 %485
    %v487 = vlaneseq
    %v488 = vshrl.u32 %v487, 7
    %v489 = vadd.s32 %v488, 9
    %490 = vset.pattern.permute.xlu0 %v489
    %491 = vperm.xlu0 %490, %v222
    %v492 = vpop.permute.xlu0 %491
    %v493 = vlaneseq
    %v494 = vshrl.u32 %v493, 7
    %v495 = vadd.s32 %v494, 1
    %496 = vset.pattern.permute.xlu0 %v495
    %497 = vperm.xlu0 %496, %v235
    %v498 = vpop.permute.xlu0 %497
    %v499 = vlaneseq
    %v500 = vshrl.u32 %v499, 7
    %v501 = vadd.s32 %v500, 9
    %502 = vset.pattern.permute.xlu0 %v501
    %503 = vperm.xlu0 %502, %v235
    %v504 = vpop.permute.xlu0 %503
    %v505 = vlaneseq
    %v506 = vshrl.u32 %v505, 7
    %v507 = vadd.s32 %v506, 1
    %508 = vset.pattern.permute.xlu0 %v507
    %509 = vperm.xlu0 %508, %v248
    %v510 = vpop.permute.xlu0 %509
    %v511 = vlaneseq
    %v512 = vshrl.u32 %v511, 7
    %v513 = vadd.s32 %v512, 9
    %514 = vset.pattern.permute.xlu0 %v513
    %515 = vperm.xlu0 %514, %v248
    %v516 = vpop.permute.xlu0 %515
    %v517 = vadd.s32 %v330, 64
    %v518 = vadd.s32 %v336, 64
    %v519 = vadd.s32 %v342, 64
    %v520 = vadd.s32 %v348, 64
    %v521 = vadd.s32 %v354, 64
    %v522 = vadd.s32 %v360, 64
    %v523 = vadd.s32 %v366, 64
    %v524 = vadd.s32 %v372, 64
    %v525 = vadd.s32 %v378, 64
    %v526 = vadd.s32 %v384, 64
    %v527 = vadd.s32 %v390, 64
    %v528 = vadd.s32 %v396, 64
    %v529 = vadd.s32 %v402, 64
    %v530 = vadd.s32 %v408, 64
    %v531 = vadd.s32 %v414, 64
    %v532 = vadd.s32 %v420, 64
    %v533 = vadd.s32 %v426, 64
    %v534 = vadd.s32 %v432, 64
    %v535 = vadd.s32 %v438, 64
    %v536 = vadd.s32 %v444, 64
    %v537 = vadd.s32 %v450, 64
    %v538 = vadd.s32 %v456, 64
    %v539 = vadd.s32 %v462, 64
    %v540 = vadd.s32 %v468, 64
    %v541 = vadd.s32 %v474, 64
    %v542 = vadd.s32 %v480, 64
    %v543 = vadd.s32 %v486, 64
    %v544 = vadd.s32 %v492, 64
    %v545 = vadd.s32 %v498, 64
    %v546 = vadd.s32 %v504, 64
    %v547 = vadd.s32 %v510, 64
    %v548 = vadd.s32 %v516, 64
    %vm549 = vcmp.eq.s32.totalorder %v517, %v51
    %vm550 = vcmp.eq.s32.totalorder %v517, %v52
    %vm551 = vcmp.eq.s32.totalorder %v518, %v51
    %vm552 = vcmp.eq.s32.totalorder %v518, %v52
    %vm553 = vcmp.eq.s32.totalorder %v519, %v51
    %vm554 = vcmp.eq.s32.totalorder %v519, %v52
    %vm555 = vcmp.eq.s32.totalorder %v520, %v51
    %vm556 = vcmp.eq.s32.totalorder %v520, %v52
    %vm557 = vcmp.eq.s32.totalorder %v521, %v51
    %vm558 = vcmp.eq.s32.totalorder %v521, %v52
    %vm559 = vcmp.eq.s32.totalorder %v522, %v51
    %vm560 = vcmp.eq.s32.totalorder %v522, %v52
    %vm561 = vcmp.eq.s32.totalorder %v523, %v51
    %vm562 = vcmp.eq.s32.totalorder %v523, %v52
    %vm563 = vcmp.eq.s32.totalorder %v524, %v51
    %vm564 = vcmp.eq.s32.totalorder %v524, %v52
    %vm565 = vcmp.eq.s32.totalorder %v525, %v51
    %vm566 = vcmp.eq.s32.totalorder %v525, %v52
    %vm567 = vcmp.eq.s32.totalorder %v526, %v51
    %vm568 = vcmp.eq.s32.totalorder %v526, %v52
    %vm569 = vcmp.eq.s32.totalorder %v527, %v51
    %vm570 = vcmp.eq.s32.totalorder %v527, %v52
    %vm571 = vcmp.eq.s32.totalorder %v528, %v51
    %vm572 = vcmp.eq.s32.totalorder %v528, %v52
    %vm573 = vcmp.eq.s32.totalorder %v529, %v51
    %vm574 = vcmp.eq.s32.totalorder %v529, %v52
    %vm575 = vcmp.eq.s32.totalorder %v530, %v51
    %vm576 = vcmp.eq.s32.totalorder %v530, %v52
    %vm577 = vcmp.eq.s32.totalorder %v531, %v51
    %vm578 = vcmp.eq.s32.totalorder %v531, %v52
    %vm579 = vcmp.eq.s32.totalorder %v532, %v51
    %vm580 = vcmp.eq.s32.totalorder %v532, %v52
    %vm581 = vcmp.eq.s32.totalorder %v533, %v51
    %vm582 = vcmp.eq.s32.totalorder %v533, %v52
    %vm583 = vcmp.eq.s32.totalorder %v534, %v51
    %vm584 = vcmp.eq.s32.totalorder %v534, %v52
    %vm585 = vcmp.eq.s32.totalorder %v535, %v51
    %vm586 = vcmp.eq.s32.totalorder %v535, %v52
    %vm587 = vcmp.eq.s32.totalorder %v536, %v51
    %vm588 = vcmp.eq.s32.totalorder %v536, %v52
    %vm589 = vcmp.eq.s32.totalorder %v537, %v51
    %vm590 = vcmp.eq.s32.totalorder %v537, %v52
    %vm591 = vcmp.eq.s32.totalorder %v538, %v51
    %vm592 = vcmp.eq.s32.totalorder %v538, %v52
    %vm593 = vcmp.eq.s32.totalorder %v539, %v51
    %vm594 = vcmp.eq.s32.totalorder %v539, %v52
    %vm595 = vcmp.eq.s32.totalorder %v540, %v51
    %vm596 = vcmp.eq.s32.totalorder %v540, %v52
    %vm597 = vcmp.eq.s32.totalorder %v541, %v51
    %vm598 = vcmp.eq.s32.totalorder %v541, %v52
    %vm599 = vcmp.eq.s32.totalorder %v542, %v51
    %vm600 = vcmp.eq.s32.totalorder %v542, %v52
    %vm601 = vcmp.eq.s32.totalorder %v543, %v51
    %vm602 = vcmp.eq.s32.totalorder %v543, %v52
    %vm603 = vcmp.eq.s32.totalorder %v544, %v51
    %vm604 = vcmp.eq.s32.totalorder %v544, %v52
    %vm605 = vcmp.eq.s32.totalorder %v545, %v51
    %vm606 = vcmp.eq.s32.totalorder %v545, %v52
    %vm607 = vcmp.eq.s32.totalorder %v546, %v51
    %vm608 = vcmp.eq.s32.totalorder %v546, %v52
    %vm609 = vcmp.eq.s32.totalorder %v547, %v51
    %vm610 = vcmp.eq.s32.totalorder %v547, %v52
    %vm611 = vcmp.eq.s32.totalorder %v548, %v51
    %vm612 = vcmp.eq.s32.totalorder %v548, %v52
    %vm613 = vmor %vm261, %vm549
    %vm614 = vmor %vm262, %vm550
    %vm615 = vmor %vm263, %vm551
    %vm616 = vmor %vm264, %vm552
    %vm617 = vmor %vm265, %vm553
    %vm618 = vmor %vm266, %vm554
    %vm619 = vmor %vm267, %vm555
    %vm620 = vmor %vm268, %vm556
    %vm621 = vmor %vm269, %vm557
    %vm622 = vmor %vm270, %vm558
    %vm623 = vmor %vm271, %vm559
    %vm624 = vmor %vm272, %vm560
    %vm625 = vmor %vm273, %vm561
    %vm626 = vmor %vm274, %vm562
    %vm627 = vmor %vm275, %vm563
    %vm628 = vmor %vm276, %vm564
    %vm629 = vmor %vm277, %vm565
    %vm630 = vmor %vm278, %vm566
    %vm631 = vmor %vm279, %vm567
    %vm632 = vmor %vm280, %vm568
    %vm633 = vmor %vm281, %vm569
    %vm634 = vmor %vm282, %vm570
    %vm635 = vmor %vm283, %vm571
    %vm636 = vmor %vm284, %vm572
    %vm637 = vmor %vm285, %vm573
    %vm638 = vmor %vm286, %vm574
    %vm639 = vmor %vm287, %vm575
    %vm640 = vmor %vm288, %vm576
    %vm641 = vmor %vm289, %vm577
    %vm642 = vmor %vm290, %vm578
    %vm643 = vmor %vm291, %vm579
    %vm644 = vmor %vm292, %vm580
    %vm645 = vmor %vm293, %vm581
    %vm646 = vmor %vm294, %vm582
    %vm647 = vmor %vm295, %vm583
    %vm648 = vmor %vm296, %vm584
    %vm649 = vmor %vm297, %vm585
    %vm650 = vmor %vm298, %vm586
    %vm651 = vmor %vm299, %vm587
    %vm652 = vmor %vm300, %vm588
    %vm653 = vmor %vm301, %vm589
    %vm654 = vmor %vm302, %vm590
    %vm655 = vmor %vm303, %vm591
    %vm656 = vmor %vm304, %vm592
    %vm657 = vmor %vm305, %vm593
    %vm658 = vmor %vm306, %vm594
    %vm659 = vmor %vm307, %vm595
    %vm660 = vmor %vm308, %vm596
    %vm661 = vmor %vm309, %vm597
    %vm662 = vmor %vm310, %vm598
    %vm663 = vmor %vm311, %vm599
    %vm664 = vmor %vm312, %vm600
    %vm665 = vmor %vm313, %vm601
    %vm666 = vmor %vm314, %vm602
    %vm667 = vmor %vm315, %vm603
    %vm668 = vmor %vm316, %vm604
    %vm669 = vmor %vm317, %vm605
    %vm670 = vmor %vm318, %vm606
    %vm671 = vmor %vm319, %vm607
    %vm672 = vmor %vm320, %vm608
    %vm673 = vmor %vm321, %vm609
    %vm674 = vmor %vm322, %vm610
    %vm675 = vmor %vm323, %vm611
    %vm676 = vmor %vm324, %vm612
    %v677 = vlaneseq
    %v678 = vshrl.u32 %v677, 7
    %v679 = vadd.s32 %v678, 2
    %680 = vset.pattern.permute.xlu0 %v679
    %681 = vperm.xlu0 %680, %v53
    %v682 = vpop.permute.xlu0 %681
    %v683 = vlaneseq
    %v684 = vshrl.u32 %v683, 7
    %v685 = vadd.s32 %v684, 10
    %686 = vset.pattern.permute.xlu0 %v685
    %687 = vperm.xlu0 %686, %v53
    %v688 = vpop.permute.xlu0 %687
    %v689 = vlaneseq
    %v690 = vshrl.u32 %v689, 7
    %v691 = vadd.s32 %v690, 2
    %692 = vset.pattern.permute.xlu0 %v691
    %693 = vperm.xlu0 %692, %v66
    %v694 = vpop.permute.xlu0 %693
    %v695 = vlaneseq
    %v696 = vshrl.u32 %v695, 7
    %v697 = vadd.s32 %v696, 10
    %698 = vset.pattern.permute.xlu0 %v697
    %699 = vperm.xlu0 %698, %v66
    %v700 = vpop.permute.xlu0 %699
    %v701 = vlaneseq
    %v702 = vshrl.u32 %v701, 7
    %v703 = vadd.s32 %v702, 2
    %704 = vset.pattern.permute.xlu0 %v703
    %705 = vperm.xlu0 %704, %v79
    %v706 = vpop.permute.xlu0 %705
    %v707 = vlaneseq
    %v708 = vshrl.u32 %v707, 7
    %v709 = vadd.s32 %v708, 10
    %710 = vset.pattern.permute.xlu0 %v709
    %711 = vperm.xlu0 %710, %v79
    %v712 = vpop.permute.xlu0 %711
    %v713 = vlaneseq
    %v714 = vshrl.u32 %v713, 7
    %v715 = vadd.s32 %v714, 2
    %716 = vset.pattern.permute.xlu0 %v715
    %717 = vperm.xlu0 %716, %v92
    %v718 = vpop.permute.xlu0 %717
    %v719 = vlaneseq
    %v720 = vshrl.u32 %v719, 7
    %v721 = vadd.s32 %v720, 10
    %722 = vset.pattern.permute.xlu0 %v721
    %723 = vperm.xlu0 %722, %v92
    %v724 = vpop.permute.xlu0 %723
    %v725 = vlaneseq
    %v726 = vshrl.u32 %v725, 7
    %v727 = vadd.s32 %v726, 2
    %728 = vset.pattern.permute.xlu0 %v727
    %729 = vperm.xlu0 %728, %v105
    %v730 = vpop.permute.xlu0 %729
    %v731 = vlaneseq
    %v732 = vshrl.u32 %v731, 7
    %v733 = vadd.s32 %v732, 10
    %734 = vset.pattern.permute.xlu0 %v733
    %735 = vperm.xlu0 %734, %v105
    %v736 = vpop.permute.xlu0 %735
    %v737 = vlaneseq
    %v738 = vshrl.u32 %v737, 7
    %v739 = vadd.s32 %v738, 2
    %740 = vset.pattern.permute.xlu0 %v739
    %741 = vperm.xlu0 %740, %v118
    %v742 = vpop.permute.xlu0 %741
    %v743 = vlaneseq
    %v744 = vshrl.u32 %v743, 7
    %v745 = vadd.s32 %v744, 10
    %746 = vset.pattern.permute.xlu0 %v745
    %747 = vperm.xlu0 %746, %v118
    %v748 = vpop.permute.xlu0 %747
    %v749 = vlaneseq
    %v750 = vshrl.u32 %v749, 7
    %v751 = vadd.s32 %v750, 2
    %752 = vset.pattern.permute.xlu0 %v751
    %753 = vperm.xlu0 %752, %v131
    %v754 = vpop.permute.xlu0 %753
    %v755 = vlaneseq
    %v756 = vshrl.u32 %v755, 7
    %v757 = vadd.s32 %v756, 10
    %758 = vset.pattern.permute.xlu0 %v757
    %759 = vperm.xlu0 %758, %v131
    %v760 = vpop.permute.xlu0 %759
    %v761 = vlaneseq
    %v762 = vshrl.u32 %v761, 7
    %v763 = vadd.s32 %v762, 2
    %764 = vset.pattern.permute.xlu0 %v763
    %765 = vperm.xlu0 %764, %v144
    %v766 = vpop.permute.xlu0 %765
    %v767 = vlaneseq
    %v768 = vshrl.u32 %v767, 7
    %v769 = vadd.s32 %v768, 10
    %770 = vset.pattern.permute.xlu0 %v769
    %771 = vperm.xlu0 %770, %v144
    %v772 = vpop.permute.xlu0 %771
    %v773 = vlaneseq
    %v774 = vshrl.u32 %v773, 7
    %v775 = vadd.s32 %v774, 2
    %776 = vset.pattern.permute.xlu0 %v775
    %777 = vperm.xlu0 %776, %v157
    %v778 = vpop.permute.xlu0 %777
    %v779 = vlaneseq
    %v780 = vshrl.u32 %v779, 7
    %v781 = vadd.s32 %v780, 10
    %782 = vset.pattern.permute.xlu0 %v781
    %783 = vperm.xlu0 %782, %v157
    %v784 = vpop.permute.xlu0 %783
    %v785 = vlaneseq
    %v786 = vshrl.u32 %v785, 7
    %v787 = vadd.s32 %v786, 2
    %788 = vset.pattern.permute.xlu0 %v787
    %789 = vperm.xlu0 %788, %v170
    %v790 = vpop.permute.xlu0 %789
    %v791 = vlaneseq
    %v792 = vshrl.u32 %v791, 7
    %v793 = vadd.s32 %v792, 10
    %794 = vset.pattern.permute.xlu0 %v793
    %795 = vperm.xlu0 %794, %v170
    %v796 = vpop.permute.xlu0 %795
    %v797 = vlaneseq
    %v798 = vshrl.u32 %v797, 7
    %v799 = vadd.s32 %v798, 2
    %800 = vset.pattern.permute.xlu0 %v799
    %801 = vperm.xlu0 %800, %v183
    %v802 = vpop.permute.xlu0 %801
    %v803 = vlaneseq
    %v804 = vshrl.u32 %v803, 7
    %v805 = vadd.s32 %v804, 10
    %806 = vset.pattern.permute.xlu0 %v805
    %807 = vperm.xlu0 %806, %v183
    %v808 = vpop.permute.xlu0 %807
    %v809 = vlaneseq
    %v810 = vshrl.u32 %v809, 7
    %v811 = vadd.s32 %v810, 2
    %812 = vset.pattern.permute.xlu0 %v811
    %813 = vperm.xlu0 %812, %v196
    %v814 = vpop.permute.xlu0 %813
    %v815 = vlaneseq
    %v816 = vshrl.u32 %v815, 7
    %v817 = vadd.s32 %v816, 10
    %818 = vset.pattern.permute.xlu0 %v817
    %819 = vperm.xlu0 %818, %v196
    %v820 = vpop.permute.xlu0 %819
    %v821 = vlaneseq
    %v822 = vshrl.u32 %v821, 7
    %v823 = vadd.s32 %v822, 2
    %824 = vset.pattern.permute.xlu0 %v823
    %825 = vperm.xlu0 %824, %v209
    %v826 = vpop.permute.xlu0 %825
    %v827 = vlaneseq
    %v828 = vshrl.u32 %v827, 7
    %v829 = vadd.s32 %v828, 10
    %830 = vset.pattern.permute.xlu0 %v829
    %831 = vperm.xlu0 %830, %v209
    %v832 = vpop.permute.xlu0 %831
    %v833 = vlaneseq
    %v834 = vshrl.u32 %v833, 7
    %v835 = vadd.s32 %v834, 2
    %836 = vset.pattern.permute.xlu0 %v835
    %837 = vperm.xlu0 %836, %v222
    %v838 = vpop.permute.xlu0 %837
    %v839 = vlaneseq
    %v840 = vshrl.u32 %v839, 7
    %v841 = vadd.s32 %v840, 10
    %842 = vset.pattern.permute.xlu0 %v841
    %843 = vperm.xlu0 %842, %v222
    %v844 = vpop.permute.xlu0 %843
    %v845 = vlaneseq
    %v846 = vshrl.u32 %v845, 7
    %v847 = vadd.s32 %v846, 2
    %848 = vset.pattern.permute.xlu0 %v847
    %849 = vperm.xlu0 %848, %v235
    %v850 = vpop.permute.xlu0 %849
    %v851 = vlaneseq
    %v852 = vshrl.u32 %v851, 7
    %v853 = vadd.s32 %v852, 10
    %854 = vset.pattern.permute.xlu0 %v853
    %855 = vperm.xlu0 %854, %v235
    %v856 = vpop.permute.xlu0 %855
    %v857 = vlaneseq
    %v858 = vshrl.u32 %v857, 7
    %v859 = vadd.s32 %v858, 2
    %860 = vset.pattern.permute.xlu0 %v859
    %861 = vperm.xlu0 %860, %v248
    %v862 = vpop.permute.xlu0 %861
    %v863 = vlaneseq
    %v864 = vshrl.u32 %v863, 7
    %v865 = vadd.s32 %v864, 10
    %866 = vset.pattern.permute.xlu0 %v865
    %867 = vperm.xlu0 %866, %v248
    %v868 = vpop.permute.xlu0 %867
    %v869 = vadd.s32 %v682, 128
    %v870 = vadd.s32 %v688, 128
    %v871 = vadd.s32 %v694, 128
    %v872 = vadd.s32 %v700, 128
    %v873 = vadd.s32 %v706, 128
    %v874 = vadd.s32 %v712, 128
    %v875 = vadd.s32 %v718, 128
    %v876 = vadd.s32 %v724, 128
    %v877 = vadd.s32 %v730, 128
    %v878 = vadd.s32 %v736, 128
    %v879 = vadd.s32 %v742, 128
    %v880 = vadd.s32 %v748, 128
    %v881 = vadd.s32 %v754, 128
    %v882 = vadd.s32 %v760, 128
    %v883 = vadd.s32 %v766, 128
    %v884 = vadd.s32 %v772, 128
    %v885 = vadd.s32 %v778, 128
    %v886 = vadd.s32 %v784, 128
    %v887 = vadd.s32 %v790, 128
    %v888 = vadd.s32 %v796, 128
    %v889 = vadd.s32 %v802, 128
    %v890 = vadd.s32 %v808, 128
    %v891 = vadd.s32 %v814, 128
    %v892 = vadd.s32 %v820, 128
    %v893 = vadd.s32 %v826, 128
    %v894 = vadd.s32 %v832, 128
    %v895 = vadd.s32 %v838, 128
    %v896 = vadd.s32 %v844, 128
    %v897 = vadd.s32 %v850, 128
    %v898 = vadd.s32 %v856, 128
    %v899 = vadd.s32 %v862, 128
    %v900 = vadd.s32 %v868, 128
    %vm901 = vcmp.eq.s32.totalorder %v869, %v51
    %vm902 = vcmp.eq.s32.totalorder %v869, %v52
    %vm903 = vcmp.eq.s32.totalorder %v870, %v51
    %vm904 = vcmp.eq.s32.totalorder %v870, %v52
    %vm905 = vcmp.eq.s32.totalorder %v871, %v51
    %vm906 = vcmp.eq.s32.totalorder %v871, %v52
    %vm907 = vcmp.eq.s32.totalorder %v872, %v51
    %vm908 = vcmp.eq.s32.totalorder %v872, %v52
    %vm909 = vcmp.eq.s32.totalorder %v873, %v51
    %vm910 = vcmp.eq.s32.totalorder %v873, %v52
    %vm911 = vcmp.eq.s32.totalorder %v874, %v51
    %vm912 = vcmp.eq.s32.totalorder %v874, %v52
    %vm913 = vcmp.eq.s32.totalorder %v875, %v51
    %vm914 = vcmp.eq.s32.totalorder %v875, %v52
    %vm915 = vcmp.eq.s32.totalorder %v876, %v51
    %vm916 = vcmp.eq.s32.totalorder %v876, %v52
    %vm917 = vcmp.eq.s32.totalorder %v877, %v51
    %vm918 = vcmp.eq.s32.totalorder %v877, %v52
    %vm919 = vcmp.eq.s32.totalorder %v878, %v51
    %vm920 = vcmp.eq.s32.totalorder %v878, %v52
    %vm921 = vcmp.eq.s32.totalorder %v879, %v51
    %vm922 = vcmp.eq.s32.totalorder %v879, %v52
    %vm923 = vcmp.eq.s32.totalorder %v880, %v51
    %vm924 = vcmp.eq.s32.totalorder %v880, %v52
    %vm925 = vcmp.eq.s32.totalorder %v881, %v51
    %vm926 = vcmp.eq.s32.totalorder %v881, %v52
    %vm927 = vcmp.eq.s32.totalorder %v882, %v51
    %vm928 = vcmp.eq.s32.totalorder %v882, %v52
    %vm929 = vcmp.eq.s32.totalorder %v883, %v51
    %vm930 = vcmp.eq.s32.totalorder %v883, %v52
    %vm931 = vcmp.eq.s32.totalorder %v884, %v51
    %vm932 = vcmp.eq.s32.totalorder %v884, %v52
    %vm933 = vcmp.eq.s32.totalorder %v885, %v51
    %vm934 = vcmp.eq.s32.totalorder %v885, %v52
    %vm935 = vcmp.eq.s32.totalorder %v886, %v51
    %vm936 = vcmp.eq.s32.totalorder %v886, %v52
    %vm937 = vcmp.eq.s32.totalorder %v887, %v51
    %vm938 = vcmp.eq.s32.totalorder %v887, %v52
    %vm939 = vcmp.eq.s32.totalorder %v888, %v51
    %vm940 = vcmp.eq.s32.totalorder %v888, %v52
    %vm941 = vcmp.eq.s32.totalorder %v889, %v51
    %vm942 = vcmp.eq.s32.totalorder %v889, %v52
    %vm943 = vcmp.eq.s32.totalorder %v890, %v51
    %vm944 = vcmp.eq.s32.totalorder %v890, %v52
    %vm945 = vcmp.eq.s32.totalorder %v891, %v51
    %vm946 = vcmp.eq.s32.totalorder %v891, %v52
    %vm947 = vcmp.eq.s32.totalorder %v892, %v51
    %vm948 = vcmp.eq.s32.totalorder %v892, %v52
    %vm949 = vcmp.eq.s32.totalorder %v893, %v51
    %vm950 = vcmp.eq.s32.totalorder %v893, %v52
    %vm951 = vcmp.eq.s32.totalorder %v894, %v51
    %vm952 = vcmp.eq.s32.totalorder %v894, %v52
    %vm953 = vcmp.eq.s32.totalorder %v895, %v51
    %vm954 = vcmp.eq.s32.totalorder %v895, %v52
    %vm955 = vcmp.eq.s32.totalorder %v896, %v51
    %vm956 = vcmp.eq.s32.totalorder %v896, %v52
    %vm957 = vcmp.eq.s32.totalorder %v897, %v51
    %vm958 = vcmp.eq.s32.totalorder %v897, %v52
    %vm959 = vcmp.eq.s32.totalorder %v898, %v51
    %vm960 = vcmp.eq.s32.totalorder %v898, %v52
    %vm961 = vcmp.eq.s32.totalorder %v899, %v51
    %vm962 = vcmp.eq.s32.totalorder %v899, %v52
    %vm963 = vcmp.eq.s32.totalorder %v900, %v51
    %vm964 = vcmp.eq.s32.totalorder %v900, %v52
    %vm965 = vmor %vm613, %vm901
    %vm966 = vmor %vm614, %vm902
    %vm967 = vmor %vm615, %vm903
    %vm968 = vmor %vm616, %vm904
    %vm969 = vmor %vm617, %vm905
    %vm970 = vmor %vm618, %vm906
    %vm971 = vmor %vm619, %vm907
    %vm972 = vmor %vm620, %vm908
    %vm973 = vmor %vm621, %vm909
    %vm974 = vmor %vm622, %vm910
    %vm975 = vmor %vm623, %vm911
    %vm976 = vmor %vm624, %vm912
    %vm977 = vmor %vm625, %vm913
    %vm978 = vmor %vm626, %vm914
    %vm979 = vmor %vm627, %vm915
    %vm980 = vmor %vm628, %vm916
    %vm981 = vmor %vm629, %vm917
    %vm982 = vmor %vm630, %vm918
    %vm983 = vmor %vm631, %vm919
    %vm984 = vmor %vm632, %vm920
    %vm985 = vmor %vm633, %vm921
    %vm986 = vmor %vm634, %vm922
    %vm987 = vmor %vm635, %vm923
    %vm988 = vmor %vm636, %vm924
    %vm989 = vmor %vm637, %vm925
    %vm990 = vmor %vm638, %vm926
    %vm991 = vmor %vm639, %vm927
    %vm992 = vmor %vm640, %vm928
    %vm993 = vmor %vm641, %vm929
    %vm994 = vmor %vm642, %vm930
    %vm995 = vmor %vm643, %vm931
    %vm996 = vmor %vm644, %vm932
    %vm997 = vmor %vm645, %vm933
    %vm998 = vmor %vm646, %vm934
    %vm999 = vmor %vm647, %vm935
    %vm1000 = vmor %vm648, %vm936
    %vm1001 = vmor %vm649, %vm937
    %vm1002 = vmor %vm650, %vm938
    %vm1003 = vmor %vm651, %vm939
    %vm1004 = vmor %vm652, %vm940
    %vm1005 = vmor %vm653, %vm941
    %vm1006 = vmor %vm654, %vm942
    %vm1007 = vmor %vm655, %vm943
    %vm1008 = vmor %vm656, %vm944
    %vm1009 = vmor %vm657, %vm945
    %vm1010 = vmor %vm658, %vm946
    %vm1011 = vmor %vm659, %vm947
    %vm1012 = vmor %vm660, %vm948
    %vm1013 = vmor %vm661, %vm949
    %vm1014 = vmor %vm662, %vm950
    %vm1015 = vmor %vm663, %vm951
    %vm1016 = vmor %vm664, %vm952
    %vm1017 = vmor %vm665, %vm953
    %vm1018 = vmor %vm666, %vm954
    %vm1019 = vmor %vm667, %vm955
    %vm1020 = vmor %vm668, %vm956
    %vm1021 = vmor %vm669, %vm957
    %vm1022 = vmor %vm670, %vm958
    %vm1023 = vmor %vm671, %vm959
    %vm1024 = vmor %vm672, %vm960
    %vm1025 = vmor %vm673, %vm961
    %vm1026 = vmor %vm674, %vm962
    %vm1027 = vmor %vm675, %vm963
    %vm1028 = vmor %vm676, %vm964
    %v1029 = vsel %vm965, 1, 0
    %v1030 = vsel %vm966, 1, 0
    %v1031 = vsel %vm967, 1, 0
    %v1032 = vsel %vm968, 1, 0
    %v1033 = vsel %vm969, 1, 0
    %v1034 = vsel %vm970, 1, 0
    %v1035 = vsel %vm971, 1, 0
    %v1036 = vsel %vm972, 1, 0
    %v1037 = vsel %vm973, 1, 0
    %v1038 = vsel %vm974, 1, 0
    %v1039 = vsel %vm975, 1, 0
    %v1040 = vsel %vm976, 1, 0
    %v1041 = vsel %vm977, 1, 0
    %v1042 = vsel %vm978, 1, 0
    %v1043 = vsel %vm979, 1, 0
    %v1044 = vsel %vm980, 1, 0
    %v1045 = vsel %vm981, 1, 0
    %v1046 = vsel %vm982, 1, 0
    %v1047 = vsel %vm983, 1, 0
    %v1048 = vsel %vm984, 1, 0
    %v1049 = vsel %vm985, 1, 0
    %v1050 = vsel %vm986, 1, 0
    %v1051 = vsel %vm987, 1, 0
    %v1052 = vsel %vm988, 1, 0
    %v1053 = vsel %vm989, 1, 0
    %v1054 = vsel %vm990, 1, 0
    %v1055 = vsel %vm991, 1, 0
    %v1056 = vsel %vm992, 1, 0
    %v1057 = vsel %vm993, 1, 0
    %v1058 = vsel %vm994, 1, 0
    %v1059 = vsel %vm995, 1, 0
    %v1060 = vsel %vm996, 1, 0
    %v1061 = vsel %vm997, 1, 0
    %v1062 = vsel %vm998, 1, 0
    %v1063 = vsel %vm999, 1, 0
    %v1064 = vsel %vm1000, 1, 0
    %v1065 = vsel %vm1001, 1, 0
    %v1066 = vsel %vm1002, 1, 0
    %v1067 = vsel %vm1003, 1, 0
    %v1068 = vsel %vm1004, 1, 0
    %v1069 = vsel %vm1005, 1, 0
    %v1070 = vsel %vm1006, 1, 0
    %v1071 = vsel %vm1007, 1, 0
    %v1072 = vsel %vm1008, 1, 0
    %v1073 = vsel %vm1009, 1, 0
    %v1074 = vsel %vm1010, 1, 0
    %v1075 = vsel %vm1011, 1, 0
    %v1076 = vsel %vm1012, 1, 0
    %v1077 = vsel %vm1013, 1, 0
    %v1078 = vsel %vm1014, 1, 0
    %v1079 = vsel %vm1015, 1, 0
    %v1080 = vsel %vm1016, 1, 0
    %v1081 = vsel %vm1017, 1, 0
    %v1082 = vsel %vm1018, 1, 0
    %v1083 = vsel %vm1019, 1, 0
    %v1084 = vsel %vm1020, 1, 0
    %v1085 = vsel %vm1021, 1, 0
    %v1086 = vsel %vm1022, 1, 0
    %v1087 = vsel %vm1023, 1, 0
    %v1088 = vsel %vm1024, 1, 0
    %v1089 = vsel %vm1025, 1, 0
    %v1090 = vsel %vm1026, 1, 0
    %v1091 = vsel %vm1027, 1, 0
    %v1092 = vsel %vm1028, 1, 0
    %v1093 = vcvt.s32.f32 %v1029
    %v1094 = vcvt.s32.f32 %v1030
    %v1095 = vcvt.s32.f32 %v1031
    %v1096 = vcvt.s32.f32 %v1032
    %v1097 = vcvt.s32.f32 %v1033
    %v1098 = vcvt.s32.f32 %v1034
    %v1099 = vcvt.s32.f32 %v1035
    %v1100 = vcvt.s32.f32 %v1036
    %v1101 = vcvt.s32.f32 %v1037
    %v1102 = vcvt.s32.f32 %v1038
    %v1103 = vcvt.s32.f32 %v1039
    %v1104 = vcvt.s32.f32 %v1040
    %v1105 = vcvt.s32.f32 %v1041
    %v1106 = vcvt.s32.f32 %v1042
    %v1107 = vcvt.s32.f32 %v1043
    %v1108 = vcvt.s32.f32 %v1044
    %v1109 = vcvt.s32.f32 %v1045
    %v1110 = vcvt.s32.f32 %v1046
    %v1111 = vcvt.s32.f32 %v1047
    %v1112 = vcvt.s32.f32 %v1048
    %v1113 = vcvt.s32.f32 %v1049
    %v1114 = vcvt.s32.f32 %v1050
    %v1115 = vcvt.s32.f32 %v1051
    %v1116 = vcvt.s32.f32 %v1052
    %v1117 = vcvt.s32.f32 %v1053
    %v1118 = vcvt.s32.f32 %v1054
    %v1119 = vcvt.s32.f32 %v1055
    %v1120 = vcvt.s32.f32 %v1056
    %v1121 = vcvt.s32.f32 %v1057
    %v1122 = vcvt.s32.f32 %v1058
    %v1123 = vcvt.s32.f32 %v1059
    %v1124 = vcvt.s32.f32 %v1060
    %v1125 = vcvt.s32.f32 %v1061
    %v1126 = vcvt.s32.f32 %v1062
    %v1127 = vcvt.s32.f32 %v1063
    %v1128 = vcvt.s32.f32 %v1064
    %v1129 = vcvt.s32.f32 %v1065
    %v1130 = vcvt.s32.f32 %v1066
    %v1131 = vcvt.s32.f32 %v1067
    %v1132 = vcvt.s32.f32 %v1068
    %v1133 = vcvt.s32.f32 %v1069
    %v1134 = vcvt.s32.f32 %v1070
    %v1135 = vcvt.s32.f32 %v1071
    %v1136 = vcvt.s32.f32 %v1072
    %v1137 = vcvt.s32.f32 %v1073
    %v1138 = vcvt.s32.f32 %v1074
    %v1139 = vcvt.s32.f32 %v1075
    %v1140 = vcvt.s32.f32 %v1076
    %v1141 = vcvt.s32.f32 %v1077
    %v1142 = vcvt.s32.f32 %v1078
    %v1143 = vcvt.s32.f32 %v1079
    %v1144 = vcvt.s32.f32 %v1080
    %v1145 = vcvt.s32.f32 %v1081
    %v1146 = vcvt.s32.f32 %v1082
    %v1147 = vcvt.s32.f32 %v1083
    %v1148 = vcvt.s32.f32 %v1084
    %v1149 = vcvt.s32.f32 %v1085
    %v1150 = vcvt.s32.f32 %v1086
    %v1151 = vcvt.s32.f32 %v1087
    %v1152 = vcvt.s32.f32 %v1088
    %v1153 = vcvt.s32.f32 %v1089
    %v1154 = vcvt.s32.f32 %v1090
    %v1155 = vcvt.s32.f32 %v1091
    %v1156 = vcvt.s32.f32 %v1092
    %v1157 = vpack.c.bf16 %v1094, %v1093
    %v1158 = vpack.c.bf16 %v1096, %v1095
    %v1159 = vpack.c.bf16 %v1098, %v1097
    %v1160 = vpack.c.bf16 %v1100, %v1099
    %v1161 = vpack.c.bf16 %v1102, %v1101
    %v1162 = vpack.c.bf16 %v1104, %v1103
    %v1163 = vpack.c.bf16 %v1106, %v1105
    %v1164 = vpack.c.bf16 %v1108, %v1107
    %v1165 = vpack.c.bf16 %v1110, %v1109
    %v1166 = vpack.c.bf16 %v1112, %v1111
    %v1167 = vpack.c.bf16 %v1114, %v1113
    %v1168 = vpack.c.bf16 %v1116, %v1115
    %v1169 = vpack.c.bf16 %v1118, %v1117
    %v1170 = vpack.c.bf16 %v1120, %v1119
    %v1171 = vpack.c.bf16 %v1122, %v1121
    %v1172 = vpack.c.bf16 %v1124, %v1123
    %v1173 = vpack.c.bf16 %v1126, %v1125
    %v1174 = vpack.c.bf16 %v1128, %v1127
    %v1175 = vpack.c.bf16 %v1130, %v1129
    %v1176 = vpack.c.bf16 %v1132, %v1131
    %v1177 = vpack.c.bf16 %v1134, %v1133
    %v1178 = vpack.c.bf16 %v1136, %v1135
    %v1179 = vpack.c.bf16 %v1138, %v1137
    %v1180 = vpack.c.bf16 %v1140, %v1139
    %v1181 = vpack.c.bf16 %v1142, %v1141
    %v1182 = vpack.c.bf16 %v1144, %v1143
    %v1183 = vpack.c.bf16 %v1146, %v1145
    %v1184 = vpack.c.bf16 %v1148, %v1147
    %v1185 = vpack.c.bf16 %v1150, %v1149
    %v1186 = vpack.c.bf16 %v1152, %v1151
    %v1187 = vpack.c.bf16 %v1154, %v1153
    %v1188 = vpack.c.bf16 %v1156, %v1155
    %v1189 = vld [vmem:[#allocation5] sm:$0xf]
    %v1190 = vld [vmem:[#allocation5 + $0x4] sm:$0xf]
    %v1191 = vld [vmem:[#allocation5 + $0x8] sm:$0xf]
    %v1192 = vld [vmem:[#allocation5 + $0xc] sm:$0xf]
    %v1193 = vld [vmem:[#allocation5 + $0x10] sm:$0xf]
    %v1194 = vld [vmem:[#allocation5 + $0x14] sm:$0xf]
    %v1195 = vld [vmem:[#allocation5 + $0x18] sm:$0xf]
    %v1196 = vld [vmem:[#allocation5 + $0x1c] sm:$0xf]
    %v1197 = vld [vmem:[#allocation5 + $0x20] sm:$0xf]
    %v1198 = vld [vmem:[#allocation5 + $0x24] sm:$0xf]
    %v1199 = vld [vmem:[#allocation5 + $0x28] sm:$0xf]
    %v1200 = vld [vmem:[#allocation5 + $0x2c] sm:$0xf]
    %v1201 = vld [vmem:[#allocation5 + $0x30] sm:$0xf]
    %v1202 = vld [vmem:[#allocation5 + $0x34] sm:$0xf]
    %v1203 = vld [vmem:[#allocation5 + $0x38] sm:$0xf]
    %v1204 = vld [vmem:[#allocation5 + $0x3c] sm:$0xf]
    %v1205 = vld [vmem:[#allocation5 + $0x40] sm:$0xf]
    %v1206 = vld [vmem:[#allocation5 + $0x44] sm:$0xf]
    %v1207 = vld [vmem:[#allocation5 + $0x48] sm:$0xf]
    %v1208 = vld [vmem:[#allocation5 + $0x4c] sm:$0xf]
    %v1209 = vld [vmem:[#allocation5 + $0x50] sm:$0xf]
    %v1210 = vld [vmem:[#allocation5 + $0x54] sm:$0xf]
    %v1211 = vld [vmem:[#allocation5 + $0x58] sm:$0xf]
    %v1212 = vld [vmem:[#allocation5 + $0x5c] sm:$0xf]
    %v1245 = vunpack.c.l.b16 %v1157
    %v1246 = vunpack.c.h.b16 %v1157
    %v1247 = vunpack.c.l.b16 %v1158
    %v1248 = vunpack.c.h.b16 %v1158
    %v1249 = vunpack.c.l.b16 %v1159
    %v1250 = vunpack.c.h.b16 %v1159
    %v1251 = vunpack.c.l.b16 %v1160
    %v1252 = vunpack.c.h.b16 %v1160
    %v1253 = vunpack.c.l.b16 %v1161
    %v1254 = vunpack.c.h.b16 %v1161
    %v1255 = vunpack.c.l.b16 %v1162
    %v1256 = vunpack.c.h.b16 %v1162
    %v1257 = vunpack.c.l.b16 %v1163
    %v1258 = vunpack.c.h.b16 %v1163
    %v1259 = vunpack.c.l.b16 %v1164
    %v1260 = vunpack.c.h.b16 %v1164
    %v1261 = vunpack.c.l.b16 %v1165
    %v1262 = vunpack.c.h.b16 %v1165
    %v1263 = vunpack.c.l.b16 %v1166
    %v1264 = vunpack.c.h.b16 %v1166
    %v1265 = vunpack.c.l.b16 %v1167
    %v1266 = vunpack.c.h.b16 %v1167
    %v1267 = vunpack.c.l.b16 %v1168
    %v1268 = vunpack.c.h.b16 %v1168
    %v1269 = vunpack.c.l.b16 %v1169
    %v1270 = vunpack.c.h.b16 %v1169
    %v1271 = vunpack.c.l.b16 %v1170
    %v1272 = vunpack.c.h.b16 %v1170
    %v1273 = vunpack.c.l.b16 %v1171
    %v1274 = vunpack.c.h.b16 %v1171
    %v1275 = vunpack.c.l.b16 %v1172
    %v1276 = vunpack.c.h.b16 %v1172
    %v1277 = vunpack.c.l.b16 %v1173
    %v1278 = vunpack.c.h.b16 %v1173
    %v1279 = vunpack.c.l.b16 %v1174
    %v1280 = vunpack.c.h.b16 %v1174
    %v1281 = vunpack.c.l.b16 %v1175
    %v1282 = vunpack.c.h.b16 %v1175
    %v1283 = vunpack.c.l.b16 %v1176
    %v1284 = vunpack.c.h.b16 %v1176
    %v1285 = vunpack.c.l.b16 %v1177
    %v1286 = vunpack.c.h.b16 %v1177
    %v1287 = vunpack.c.l.b16 %v1178
    %v1288 = vunpack.c.h.b16 %v1178
    %v1289 = vunpack.c.l.b16 %v1179
    %v1290 = vunpack.c.h.b16 %v1179
    %v1291 = vunpack.c.l.b16 %v1180
    %v1292 = vunpack.c.h.b16 %v1180
    %v1293 = vunpack.c.l.b16 %v1181
    %v1294 = vunpack.c.h.b16 %v1181
    %v1295 = vunpack.c.l.b16 %v1182
    %v1296 = vunpack.c.h.b16 %v1182
    %v1297 = vunpack.c.l.b16 %v1183
    %v1298 = vunpack.c.h.b16 %v1183
    %v1299 = vunpack.c.l.b16 %v1184
    %v1300 = vunpack.c.h.b16 %v1184
    %v1301 = vunpack.c.l.b16 %v1185
    %v1302 = vunpack.c.h.b16 %v1185
    %v1303 = vunpack.c.l.b16 %v1186
    %v1304 = vunpack.c.h.b16 %v1186
    %v1305 = vunpack.c.l.b16 %v1187
    %v1306 = vunpack.c.h.b16 %v1187
    %v1307 = vunpack.c.l.b16 %v1188
    %v1308 = vunpack.c.h.b16 %v1188
    %v1309 = vpack.c.b16 %v1247, %v1245
    %v1310 = vpack.c.b16 %v1248, %v1246
    %v1311 = vpack.c.b16 %v1251, %v1249
    %v1312 = vpack.c.b16 %v1252, %v1250
    %v1313 = vpack.c.b16 %v1255, %v1253
    %v1314 = vpack.c.b16 %v1256, %v1254
    %v1315 = vpack.c.b16 %v1259, %v1257
    %v1316 = vpack.c.b16 %v1260, %v1258
    %v1317 = vpack.c.b16 %v1263, %v1261
    %v1318 = vpack.c.b16 %v1264, %v1262
    %v1319 = vpack.c.b16 %v1267, %v1265
    %v1320 = vpack.c.b16 %v1268, %v1266
    %v1321 = vpack.c.b16 %v1271, %v1269
    %v1322 = vpack.c.b16 %v1272, %v1270
    %v1323 = vpack.c.b16 %v1275, %v1273
    %v1324 = vpack.c.b16 %v1276, %v1274
    %v1325 = vpack.c.b16 %v1279, %v1277
    %v1326 = vpack.c.b16 %v1280, %v1278
    %v1327 = vpack.c.b16 %v1283, %v1281
    %v1328 = vpack.c.b16 %v1284, %v1282
    %v1329 = vpack.c.b16 %v1287, %v1285
    %v1330 = vpack.c.b16 %v1288, %v1286
    %v1331 = vpack.c.b16 %v1291, %v1289
    %v1332 = vpack.c.b16 %v1292, %v1290
    %v1333 = vpack.c.b16 %v1295, %v1293
    %v1334 = vpack.c.b16 %v1296, %v1294
    %v1335 = vpack.c.b16 %v1299, %v1297
    %v1336 = vpack.c.b16 %v1300, %v1298
    %v1337 = vpack.c.b16 %v1303, %v1301
    %v1338 = vpack.c.b16 %v1304, %v1302
    %v1339 = vpack.c.b16 %v1307, %v1305
    %v1340 = vpack.c.b16 %v1308, %v1306
    %v1381 = vunpack.c.l.b16 %v1189
    %v1382 = vunpack.c.l.b16 %v1190
    %v1383 = vunpack.c.l.b16 %v1191
    %v1384 = vunpack.c.l.b16 %v1192
    %v1385 = vunpack.c.l.b16 %v1193
    %v1386 = vunpack.c.l.b16 %v1194
    %v1387 = vunpack.c.l.b16 %v1195
    %v1388 = vunpack.c.l.b16 %v1196
    %v1389 = vunpack.c.l.b16 %v1197
    %v1390 = vunpack.c.l.b16 %v1198
    %v1391 = vunpack.c.l.b16 %v1199
    %v1392 = vunpack.c.l.b16 %v1200
    %v1393 = vunpack.c.l.b16 %v1201
    %v1394 = vunpack.c.l.b16 %v1202
    %v1395 = vunpack.c.l.b16 %v1203
    %v1396 = vunpack.c.l.b16 %v1204
    %v1397 = vunpack.c.l.b16 %v1205
    %v1398 = vunpack.c.l.b16 %v1206
    %v1399 = vunpack.c.l.b16 %v1207
    %v1400 = vunpack.c.l.b16 %v1208
    %v1401 = vunpack.c.l.b16 %v1209
    %v1402 = vunpack.c.l.b16 %v1210
    %v1403 = vunpack.c.l.b16 %v1211
    %v1404 = vunpack.c.l.b16 %v1212
    %v1405 = vpack.c.b16 %v1382, %v1381
    %v1406 = vpack.c.b16 %v1384, %v1383
    %v1407 = vpack.c.b16 %v1386, %v1385
    %v1408 = vpack.c.b16 %v1388, %v1387
    %v1409 = vpack.c.b16 %v1390, %v1389
    %v1410 = vpack.c.b16 %v1392, %v1391
    %v1411 = vpack.c.b16 %v1394, %v1393
    %v1412 = vpack.c.b16 %v1396, %v1395
    %v1413 = vpack.c.b16 %v1398, %v1397
    %v1414 = vpack.c.b16 %v1400, %v1399
    %v1415 = vpack.c.b16 %v1402, %v1401
    %v1416 = vpack.c.b16 %v1404, %v1403
    %vm1429 = vcmask 523264
    %v1431 = vsel %vm1429, %v1310, 0
    %v1434 = vsel %vm1429, %v1312, 0
    %v1437 = vsel %vm1429, %v1314, 0
    %v1440 = vsel %vm1429, %v1316, 0
    %v1443 = vsel %vm1429, %v1318, 0
    %v1446 = vsel %vm1429, %v1320, 0
    %v1449 = vsel %vm1429, %v1322, 0
    %v1452 = vsel %vm1429, %v1324, 0
    %v1455 = vsel %vm1429, %v1326, 0
    %v1458 = vsel %vm1429, %v1328, 0
    %v1461 = vsel %vm1429, %v1330, 0
    %v1464 = vsel %vm1429, %v1332, 0
    %v1467 = vsel %vm1429, %v1334, 0
    %v1470 = vsel %vm1429, %v1336, 0
    %v1473 = vsel %vm1429, %v1338, 0
    %v1476 = vsel %vm1429, %v1340, 0
    %1478 = vmatpush.bf16.msra.mxu0 %v1412
    %1479 = vmatpush.bf16.msra.mxu0 %v1411
    %1480 = vmatpush.bf16.msra.mxu0 %v1410
    %1481 = vmatpush.bf16.msra.mxu0 %v1409
    %1482 = vmatpush.bf16.msra.mxu0 %v1408
    %1483 = vmatpush.bf16.msra.mxu0 %v1407
    %1484 = vmatpush.bf16.msra.mxu0 %v1406
    %1485 = vmatpush.bf16.msra.mxu0 %v1405
    %1486 = vmatmul.bf16.gmra.mxu0 %v1309
    %v1487 = vpop.f32.mrf.mxu0
    %v1488 = vadd.f32 0.0, %v1487
    %v1489 = vpop.f32.mrf.mxu0
    %v1490 = vadd.f32 0.0, %v1489
    %1491 = vmatmul.bf16.gmra.mxu0 %v1311
    %v1492 = vpop.f32.mrf.mxu0
    %v1493 = vadd.f32 0.0, %v1492
    %v1494 = vpop.f32.mrf.mxu0
    %v1495 = vadd.f32 0.0, %v1494
    %1496 = vmatmul.bf16.gmra.mxu0 %v1313
    %v1497 = vpop.f32.mrf.mxu0
    %v1498 = vadd.f32 0.0, %v1497
    %v1499 = vpop.f32.mrf.mxu0
    %v1500 = vadd.f32 0.0, %v1499
    %1501 = vmatmul.bf16.gmra.mxu0 %v1315
    %v1502 = vpop.f32.mrf.mxu0
    %v1503 = vadd.f32 0.0, %v1502
    %v1504 = vpop.f32.mrf.mxu0
    %v1505 = vadd.f32 0.0, %v1504
    %1506 = vmatmul.bf16.gmra.mxu0 %v1317
    %v1507 = vpop.f32.mrf.mxu0
    %v1508 = vadd.f32 0.0, %v1507
    %v1509 = vpop.f32.mrf.mxu0
    %v1510 = vadd.f32 0.0, %v1509
    %1511 = vmatmul.bf16.gmra.mxu0 %v1319
    %v1512 = vpop.f32.mrf.mxu0
    %v1513 = vadd.f32 0.0, %v1512
    %v1514 = vpop.f32.mrf.mxu0
    %v1515 = vadd.f32 0.0, %v1514
    %1516 = vmatmul.bf16.gmra.mxu0 %v1321
    %v1517 = vpop.f32.mrf.mxu0
    %v1518 = vadd.f32 0.0, %v1517
    %v1519 = vpop.f32.mrf.mxu0
    %v1520 = vadd.f32 0.0, %v1519
    %1521 = vmatmul.bf16.gmra.mxu0 %v1323
    %v1522 = vpop.f32.mrf.mxu0
    %v1523 = vadd.f32 0.0, %v1522
    %v1524 = vpop.f32.mrf.mxu0
    %v1525 = vadd.f32 0.0, %v1524
    %1526 = vmatmul.bf16.gmra.mxu0 %v1325
    %v1527 = vpop.f32.mrf.mxu0
    %v1528 = vadd.f32 0.0, %v1527
    %v1529 = vpop.f32.mrf.mxu0
    %v1530 = vadd.f32 0.0, %v1529
    %1531 = vmatmul.bf16.gmra.mxu0 %v1327
    %v1532 = vpop.f32.mrf.mxu0
    %v1533 = vadd.f32 0.0, %v1532
    %v1534 = vpop.f32.mrf.mxu0
    %v1535 = vadd.f32 0.0, %v1534
    %1536 = vmatmul.bf16.gmra.mxu0 %v1329
    %v1537 = vpop.f32.mrf.mxu0
    %v1538 = vadd.f32 0.0, %v1537
    %v1539 = vpop.f32.mrf.mxu0
    %v1540 = vadd.f32 0.0, %v1539
    %1541 = vmatmul.bf16.gmra.mxu0 %v1331
    %v1542 = vpop.f32.mrf.mxu0
    %v1543 = vadd.f32 0.0, %v1542
    %v1544 = vpop.f32.mrf.mxu0
    %v1545 = vadd.f32 0.0, %v1544
    %1546 = vmatmul.bf16.gmra.mxu0 %v1333
    %v1547 = vpop.f32.mrf.mxu0
    %v1548 = vadd.f32 0.0, %v1547
    %v1549 = vpop.f32.mrf.mxu0
    %v1550 = vadd.f32 0.0, %v1549
    %1551 = vmatmul.bf16.gmra.mxu0 %v1335
    %v1552 = vpop.f32.mrf.mxu0
    %v1553 = vadd.f32 0.0, %v1552
    %v1554 = vpop.f32.mrf.mxu0
    %v1555 = vadd.f32 0.0, %v1554
    %1556 = vmatmul.bf16.gmra.mxu0 %v1337
    %v1557 = vpop.f32.mrf.mxu0
    %v1558 = vadd.f32 0.0, %v1557
    %v1559 = vpop.f32.mrf.mxu0
    %v1560 = vadd.f32 0.0, %v1559
    %1561 = vmatmul.bf16.gmra.mxu0 %v1339
    %v1562 = vpop.f32.mrf.mxu0
    %v1563 = vadd.f32 0.0, %v1562
    %v1564 = vpop.f32.mrf.mxu0
    %v1565 = vadd.f32 0.0, %v1564
    %1566 = vdwg.mxu0
    %1567 = vmatpush.bf16.msra.mxu0 0
    %1568 = vmatpush.bf16.msra.mxu0 0
    %1569 = vmatpush.bf16.msra.mxu0 0
    %1570 = vmatpush.bf16.msra.mxu0 0
    %1571 = vmatpush.bf16.msra.mxu0 %v1416
    %1572 = vmatpush.bf16.msra.mxu0 %v1415
    %1573 = vmatpush.bf16.msra.mxu0 %v1414
    %1574 = vmatpush.bf16.msra.mxu0 %v1413
    %1575 = vmatmul.bf16.gmra.mxu0 %v1431
    %v1576 = vpop.f32.mrf.mxu0
    %v1577 = vadd.f32 %v1488, %v1576
    %v1578 = vpop.f32.mrf.mxu0
    %v1579 = vadd.f32 %v1490, %v1578
    %1580 = vmatmul.bf16.gmra.mxu0 %v1434
    %v1581 = vpop.f32.mrf.mxu0
    %v1582 = vadd.f32 %v1493, %v1581
    %v1583 = vpop.f32.mrf.mxu0
    %v1584 = vadd.f32 %v1495, %v1583
    %1585 = vmatmul.bf16.gmra.mxu0 %v1437
    %v1586 = vpop.f32.mrf.mxu0
    %v1587 = vadd.f32 %v1498, %v1586
    %v1588 = vpop.f32.mrf.mxu0
    %v1589 = vadd.f32 %v1500, %v1588
    %1590 = vmatmul.bf16.gmra.mxu0 %v1440
    %v1591 = vpop.f32.mrf.mxu0
    %v1592 = vadd.f32 %v1503, %v1591
    %v1593 = vpop.f32.mrf.mxu0
    %v1594 = vadd.f32 %v1505, %v1593
    %1595 = vmatmul.bf16.gmra.mxu0 %v1443
    %v1596 = vpop.f32.mrf.mxu0
    %v1597 = vadd.f32 %v1508, %v1596
    %v1598 = vpop.f32.mrf.mxu0
    %v1599 = vadd.f32 %v1510, %v1598
    %1600 = vmatmul.bf16.gmra.mxu0 %v1446
    %v1601 = vpop.f32.mrf.mxu0
    %v1602 = vadd.f32 %v1513, %v1601
    %v1603 = vpop.f32.mrf.mxu0
    %v1604 = vadd.f32 %v1515, %v1603
    %1605 = vmatmul.bf16.gmra.mxu0 %v1449
    %v1606 = vpop.f32.mrf.mxu0
    %v1607 = vadd.f32 %v1518, %v1606
    %v1608 = vpop.f32.mrf.mxu0
    %v1609 = vadd.f32 %v1520, %v1608
    %1610 = vmatmul.bf16.gmra.mxu0 %v1452
    %v1611 = vpop.f32.mrf.mxu0
    %v1612 = vadd.f32 %v1523, %v1611
    %v1613 = vpop.f32.mrf.mxu0
    %v1614 = vadd.f32 %v1525, %v1613
    %1615 = vmatmul.bf16.gmra.mxu0 %v1455
    %v1616 = vpop.f32.mrf.mxu0
    %v1617 = vadd.f32 %v1528, %v1616
    %v1618 = vpop.f32.mrf.mxu0
    %v1619 = vadd.f32 %v1530, %v1618
    %1620 = vmatmul.bf16.gmra.mxu0 %v1458
    %v1621 = vpop.f32.mrf.mxu0
    %v1622 = vadd.f32 %v1533, %v1621
    %v1623 = vpop.f32.mrf.mxu0
    %v1624 = vadd.f32 %v1535, %v1623
    %1625 = vmatmul.bf16.gmra.mxu0 %v1461
    %v1626 = vpop.f32.mrf.mxu0
    %v1627 = vadd.f32 %v1538, %v1626
    %v1628 = vpop.f32.mrf.mxu0
    %v1629 = vadd.f32 %v1540, %v1628
    %1630 = vmatmul.bf16.gmra.mxu0 %v1464
    %v1631 = vpop.f32.mrf.mxu0
    %v1632 = vadd.f32 %v1543, %v1631
    %v1633 = vpop.f32.mrf.mxu0
    %v1634 = vadd.f32 %v1545, %v1633
    %1635 = vmatmul.bf16.gmra.mxu0 %v1467
    %v1636 = vpop.f32.mrf.mxu0
    %v1637 = vadd.f32 %v1548, %v1636
    %v1638 = vpop.f32.mrf.mxu0
    %v1639 = vadd.f32 %v1550, %v1638
    %1640 = vmatmul.bf16.gmra.mxu0 %v1470
    %v1641 = vpop.f32.mrf.mxu0
    %v1642 = vadd.f32 %v1553, %v1641
    %v1643 = vpop.f32.mrf.mxu0
    %v1644 = vadd.f32 %v1555, %v1643
    %1645 = vmatmul.bf16.gmra.mxu0 %v1473
    %v1646 = vpop.f32.mrf.mxu0
    %v1647 = vadd.f32 %v1558, %v1646
    %v1648 = vpop.f32.mrf.mxu0
    %v1649 = vadd.f32 %v1560, %v1648
    %1650 = vmatmul.bf16.gmra.mxu0 %v1476
    %v1651 = vpop.f32.mrf.mxu0
    %v1652 = vadd.f32 %v1563, %v1651
    %v1653 = vpop.f32.mrf.mxu0
    %v1654 = vadd.f32 %v1565, %v1653
    %1655 = vdwg.mxu0
    %v1656 = vlaneseq
    %v1657 = vshrl.u32 %v1656, 7
    %v1658 = vadd.s32 %v1657, 8
    %vm1659 = vcmp.lt.s32.totalorder %v1657, 14
    %vm1660 = vcmp.lt.s32.totalorder %v1658, 14
    %v1661 = vsel %vm1659, 1, 0
    %v1662 = vsel %vm1660, 1, 0
    %vm1663 = vcmp.eq.s32.totalorder %v1661, 1
    %vm1664 = vcmp.eq.s32.totalorder %v1662, 1
    %v1665 = vsel %vm1663, %v1577, -3.4028235e+38
    %v1666 = vsel %vm1664, %v1579, -3.4028235e+38
    %v1667 = vsel %vm1663, %v1582, -3.4028235e+38
    %v1668 = vsel %vm1664, %v1584, -3.4028235e+38
    %v1669 = vsel %vm1663, %v1587, -3.4028235e+38
    %v1670 = vsel %vm1664, %v1589, -3.4028235e+38
    %v1671 = vsel %vm1663, %v1592, -3.4028235e+38
    %v1672 = vsel %vm1664, %v1594, -3.4028235e+38
    %v1673 = vsel %vm1663, %v1597, -3.4028235e+38
    %v1674 = vsel %vm1664, %v1599, -3.4028235e+38
    %v1675 = vsel %vm1663, %v1602, -3.4028235e+38
    %v1676 = vsel %vm1664, %v1604, -3.4028235e+38
    %v1677 = vsel %vm1663, %v1607, -3.4028235e+38
    %v1678 = vsel %vm1664, %v1609, -3.4028235e+38
    %v1679 = vsel %vm1663, %v1612, -3.4028235e+38
    %v1680 = vsel %vm1664, %v1614, -3.4028235e+38
    %v1681 = vsel %vm1663, %v1617, -3.4028235e+38
    %v1682 = vsel %vm1664, %v1619, -3.4028235e+38
    %v1683 = vsel %vm1663, %v1622, -3.4028235e+38
    %v1684 = vsel %vm1664, %v1624, -3.4028235e+38
    %v1685 = vsel %vm1663, %v1627, -3.4028235e+38
    %v1686 = vsel %vm1664, %v1629, -3.4028235e+38
    %v1687 = vsel %vm1663, %v1632, -3.4028235e+38
    %v1688 = vsel %vm1664, %v1634, -3.4028235e+38
    %v1689 = vsel %vm1663, %v1637, -3.4028235e+38
    %v1690 = vsel %vm1664, %v1639, -3.4028235e+38
    %v1691 = vsel %vm1663, %v1642, -3.4028235e+38
    %v1692 = vsel %vm1664, %v1644, -3.4028235e+38
    %v1693 = vsel %vm1663, %v1647, -3.4028235e+38
    %v1694 = vsel %vm1664, %v1649, -3.4028235e+38
    %v1695 = vsel %vm1663, %v1652, -3.4028235e+38
    %v1696 = vsel %vm1664, %v1654, -3.4028235e+38
    %v1697 = vmax.f32 %v1665, %v1666
    %v1698 = vrot.slane %v1697, 4
    %v1699 = vmax.f32 %v1697, %v1698
    %v1700 = vrot.slane %v1699, 2
    %v1701 = vmax.f32 %v1699, %v1700
    %v1702 = vrot.slane %v1701, 1
    %v1703 = vmax.f32 %v1701, %v1702
    %v1704 = vmax.f32 %v1667, %v1668
    %v1705 = vrot.slane %v1704, 4
    %v1706 = vmax.f32 %v1704, %v1705
    %v1707 = vrot.slane %v1706, 2
    %v1708 = vmax.f32 %v1706, %v1707
    %v1709 = vrot.slane %v1708, 1
    %v1710 = vmax.f32 %v1708, %v1709
    %v1711 = vmax.f32 %v1669, %v1670
    %v1712 = vrot.slane %v1711, 4
    %v1713 = vmax.f32 %v1711, %v1712
    %v1714 = vrot.slane %v1713, 2
    %v1715 = vmax.f32 %v1713, %v1714
    %v1716 = vrot.slane %v1715, 1
    %v1717 = vmax.f32 %v1715, %v1716
    %v1718 = vmax.f32 %v1671, %v1672
    %v1719 = vrot.slane %v1718, 4
    %v1720 = vmax.f32 %v1718, %v1719
    %v1721 = vrot.slane %v1720, 2
    %v1722 = vmax.f32 %v1720, %v1721
    %v1723 = vrot.slane %v1722, 1
    %v1724 = vmax.f32 %v1722, %v1723
    %v1725 = vmax.f32 %v1673, %v1674
    %v1726 = vrot.slane %v1725, 4
    %v1727 = vmax.f32 %v1725, %v1726
    %v1728 = vrot.slane %v1727, 2
    %v1729 = vmax.f32 %v1727, %v1728
    %v1730 = vrot.slane %v1729, 1
    %v1731 = vmax.f32 %v1729, %v1730
    %v1732 = vmax.f32 %v1675, %v1676
    %v1733 = vrot.slane %v1732, 4
    %v1734 = vmax.f32 %v1732, %v1733
    %v1735 = vrot.slane %v1734, 2
    %v1736 = vmax.f32 %v1734, %v1735
    %v1737 = vrot.slane %v1736, 1
    %v1738 = vmax.f32 %v1736, %v1737
    %v1739 = vmax.f32 %v1677, %v1678
    %v1740 = vrot.slane %v1739, 4
    %v1741 = vmax.f32 %v1739, %v1740
    %v1742 = vrot.slane %v1741, 2
    %v1743 = vmax.f32 %v1741, %v1742
    %v1744 = vrot.slane %v1743, 1
    %v1745 = vmax.f32 %v1743, %v1744
    %v1746 = vmax.f32 %v1679, %v1680
    %v1747 = vrot.slane %v1746, 4
    %v1748 = vmax.f32 %v1746, %v1747
    %v1749 = vrot.slane %v1748, 2
    %v1750 = vmax.f32 %v1748, %v1749
    %v1751 = vrot.slane %v1750, 1
    %v1752 = vmax.f32 %v1750, %v1751
    %v1753 = vmax.f32 %v1681, %v1682
    %v1754 = vrot.slane %v1753, 4
    %v1755 = vmax.f32 %v1753, %v1754
    %v1756 = vrot.slane %v1755, 2
    %v1757 = vmax.f32 %v1755, %v1756
    %v1758 = vrot.slane %v1757, 1
    %v1759 = vmax.f32 %v1757, %v1758
    %v1760 = vmax.f32 %v1683, %v1684
    %v1761 = vrot.slane %v1760, 4
    %v1762 = vmax.f32 %v1760, %v1761
    %v1763 = vrot.slane %v1762, 2
    %v1764 = vmax.f32 %v1762, %v1763
    %v1765 = vrot.slane %v1764, 1
    %v1766 = vmax.f32 %v1764, %v1765
    %v1767 = vmax.f32 %v1685, %v1686
    %v1768 = vrot.slane %v1767, 4
    %v1769 = vmax.f32 %v1767, %v1768
    %v1770 = vrot.slane %v1769, 2
    %v1771 = vmax.f32 %v1769, %v1770
    %v1772 = vrot.slane %v1771, 1
    %v1773 = vmax.f32 %v1771, %v1772
    %v1774 = vmax.f32 %v1687, %v1688
    %v1775 = vrot.slane %v1774, 4
    %v1776 = vmax.f32 %v1774, %v1775
    %v1777 = vrot.slane %v1776, 2
    %v1778 = vmax.f32 %v1776, %v1777
    %v1779 = vrot.slane %v1778, 1
    %v1780 = vmax.f32 %v1778, %v1779
    %v1781 = vmax.f32 %v1689, %v1690
    %v1782 = vrot.slane %v1781, 4
    %v1783 = vmax.f32 %v1781, %v1782
    %v1784 = vrot.slane %v1783, 2
    %v1785 = vmax.f32 %v1783, %v1784
    %v1786 = vrot.slane %v1785, 1
    %v1787 = vmax.f32 %v1785, %v1786
    %v1788 = vmax.f32 %v1691, %v1692
    %v1789 = vrot.slane %v1788, 4
    %v1790 = vmax.f32 %v1788, %v1789
    %v1791 = vrot.slane %v1790, 2
    %v1792 = vmax.f32 %v1790, %v1791
    %v1793 = vrot.slane %v1792, 1
    %v1794 = vmax.f32 %v1792, %v1793
    %v1795 = vmax.f32 %v1693, %v1694
    %v1796 = vrot.slane %v1795, 4
    %v1797 = vmax.f32 %v1795, %v1796
    %v1798 = vrot.slane %v1797, 2
    %v1799 = vmax.f32 %v1797, %v1798
    %v1800 = vrot.slane %v1799, 1
    %v1801 = vmax.f32 %v1799, %v1800
    %v1802 = vmax.f32 %v1695, %v1696
    %v1803 = vrot.slane %v1802, 4
    %v1804 = vmax.f32 %v1802, %v1803
    %v1805 = vrot.slane %v1804, 2
    %v1806 = vmax.f32 %v1804, %v1805
    %v1807 = vrot.slane %v1806, 1
    %v1808 = vmax.f32 %v1806, %v1807
    %v1809 = vld [vmem:[%s2] sm:$0x1]
    %v1811 = vperm.slane %v1809, 0
    %v1813 = vadd.f32 %v1703, %v1811
    %v1814 = vadd.f32 %v1710, %v1811
    %v1815 = vadd.f32 %v1717, %v1811
    %v1816 = vadd.f32 %v1724, %v1811
    %v1817 = vadd.f32 %v1731, %v1811
    %v1818 = vadd.f32 %v1738, %v1811
    %v1819 = vadd.f32 %v1745, %v1811
    %v1820 = vadd.f32 %v1752, %v1811
    %v1821 = vadd.f32 %v1759, %v1811
    %v1822 = vadd.f32 %v1766, %v1811
    %v1823 = vadd.f32 %v1773, %v1811
    %v1824 = vadd.f32 %v1780, %v1811
    %v1825 = vadd.f32 %v1787, %v1811
    %v1826 = vadd.f32 %v1794, %v1811
    %v1827 = vadd.f32 %v1801, %v1811
    %v1828 = vadd.f32 %v1808, %v1811
    %v1829 = vmax.f32 %v1813, 0.0
    %v1830 = vmax.f32 %v1814, 0.0
    %v1831 = vmax.f32 %v1815, 0.0
    %v1832 = vmax.f32 %v1816, 0.0
    %v1833 = vmax.f32 %v1817, 0.0
    %v1834 = vmax.f32 %v1818, 0.0
    %v1835 = vmax.f32 %v1819, 0.0
    %v1836 = vmax.f32 %v1820, 0.0
    %v1837 = vmax.f32 %v1821, 0.0
    %v1838 = vmax.f32 %v1822, 0.0
    %v1839 = vmax.f32 %v1823, 0.0
    %v1840 = vmax.f32 %v1824, 0.0
    %v1841 = vmax.f32 %v1825, 0.0
    %v1842 = vmax.f32 %v1826, 0.0
    %v1843 = vmax.f32 %v1827, 0.0
    %v1844 = vmax.f32 %v1828, 0.0
    %v1861 = vrot.slane %v1830, 7
    %vm1862 = vcmask 1041409
    %v1863 = vsel %vm1862, %v1861, %v1829
    %v1864 = vrot.slane %v1831, 6
    %vm1865 = vcmask 1042434
    %v1866 = vsel %vm1865, %v1864, %v1863
    %v1867 = vrot.slane %v1832, 5
    %vm1868 = vcmask 1043459
    %v1869 = vsel %vm1868, %v1867, %v1866
    %v1870 = vrot.slane %v1833, 4
    %vm1871 = vcmask 1044484
    %v1872 = vsel %vm1871, %v1870, %v1869
    %v1873 = vrot.slane %v1834, 3
    %vm1874 = vcmask 1045509
    %v1875 = vsel %vm1874, %v1873, %v1872
    %v1876 = vrot.slane %v1835, 2
    %vm1877 = vcmask 1046534
    %v1878 = vsel %vm1877, %v1876, %v1875
    %v1879 = vrot.slane %v1836, 1
    %vm1880 = vcmask 1047559
    %v1881 = vsel %vm1880, %v1879, %v1878
    %v1882 = vrot.slane %v1838, 7
    %v1883 = vsel %vm1862, %v1882, %v1837
    %v1884 = vrot.slane %v1839, 6
    %v1885 = vsel %vm1865, %v1884, %v1883
    %v1886 = vrot.slane %v1840, 5
    %v1887 = vsel %vm1868, %v1886, %v1885
    %v1888 = vrot.slane %v1841, 4
    %v1889 = vsel %vm1871, %v1888, %v1887
    %v1890 = vrot.slane %v1842, 3
    %v1891 = vsel %vm1874, %v1890, %v1889
    %v1892 = vrot.slane %v1843, 2
    %v1893 = vsel %vm1877, %v1892, %v1891
    %v1894 = vrot.slane %v1844, 1
    %v1895 = vsel %vm1880, %v1894, %v1893
    %1898 = vst [vmem:[#allocation7] sm:$0xff] %v1881
    %1899 = vst [vmem:[#allocation7 + $0x8] sm:$0xff] %v1895
    // Predicated region
    $region22: #{tpu_custom_call.1} parent=1 // pred_check
      _
    $region23: #{tpu_custom_call.1} parent=1 // pred_check_branch
      %1901 = sbr.rel (0) target = $region25
    $region24: #{tpu_custom_call.1} parent=1 // pred_region
      %1903 = vsyncadd [#allocation4], 0
      %s1904 = sshll.u32 [#allocation7], 4
      %s1905 = int_to_ptr.vmem [resolvable:$true] %s1904
      %s1906 = sshll.u32 %s3, 4
      %s1907 = int_to_ptr.hbm [resolvable:$true] %s1906
      %1912 = dma.vmem_to_hbm [thread:$0]  %s1905, 256, %s1907, [#allocation4], 128, 128, 8
    $region25: #{tpu_custom_call.1} parent=1 // pred_fallthru
      _
    // Predicated region
    $region26: #{tpu_custom_call.1} parent=1 // pred_check
      _
    $region27: #{tpu_custom_call.1} parent=1 // pred_check_branch
      %1914 = sbr.rel (0) target = $region29
    $region28: #{tpu_custom_call.1} parent=1 // pred_region
      %1916 = dma.done [#allocation4], 256
    $region29: #{tpu_custom_call.1} parent=1 // pred_fallthru
      _
    %1917 = vsyncpa [#allocation3], 1
    %1918 = vsyncpa [#allocation6], 1
    %1919 = vsyncpa [#allocation4], 1

</llo_original>
